<compile_context>
chip_gen: v6e
topology: v6e:2x2x1
jax: 0.10.0
libtpu: 0.0.40
codegen_flags: <defaults>
</compile_context>

<pallas_src>
import math
from functools import partial

import jax
import jax.numpy as jnp
from jax import lax
from jax.experimental import pallas as pl
from jax.experimental.pallas import tpu as pltpu

F32 = jnp.float32
BF16 = jnp.bfloat16


# ----------------------------- small helpers --------------------------------

def _ln(x, g, b, eps=1e-5):
    # fp32 LayerNorm over the last axis; g, b are (1, C) and broadcast.
    mu = jnp.mean(x, axis=-1, keepdims=True)
    xc = x - mu
    var = jnp.mean(xc * xc, axis=-1, keepdims=True)
    return xc * lax.rsqrt(var + eps) * g + b


def _vmem_limit_bytes():
    # v5e/v6e: 128 MiB physical VMEM -> allow 64 MiB scoped.
    # v7x:      64 MiB physical      -> 48 MiB, leave runtime headroom.
    try:
        cap = pltpu.get_tpu_info().vmem_capacity_bytes
    except Exception:
        cap = 128 * 1024 * 1024
    return int(min(64 * 1024 * 1024, cap * 3 // 4))


# ------------------------------- Pallas kernels -----------------------------

def _gpt_block_kernel(x_ref, ln1_g, ln1_b, wqkv, bqkv, wproj, bproj,
                      ln2_g, ln2_b, wfc, bfc, wmp, bmp, lnf_g, lnf_b,
                      xo_ref, gram_ref, aux_ref, gmean_ref,
                      y_scr,
                      *, n_head, head_dim, skip_mlp):
    """One fused GPT block + consensus epilogue for one (batch, iter, layer)
    grid step.  xo_ref is a VMEM-resident accumulator across the (iter, layer)
    grid axes (its block index only depends on the batch axis)."""
    T = xo_ref.shape[1]
    C = xo_ref.shape[2]

    # Initialize the resident activation from the embedding on the first
    # (iter, layer) step of each batch element.
    @pl.when(jnp.logical_and(pl.program_id(1) == 0, pl.program_id(2) == 0))
    def _():
        xo_ref[...] = x_ref[...]

    x = xo_ref[0]                                             # (T, C) fp32

    # ---- attention branch: LN1 -> fused QKV -> per-head causal attn ----
    h = _ln(x, ln1_g[0], ln1_b[0])
    qkv = jnp.dot(h.astype(BF16), wqkv[0],
                  preferred_element_type=F32) + bqkv[0]       # (T, 3C) fp32

    qi = lax.broadcasted_iota(jnp.int32, (T, T), 0)
    ki = lax.broadcasted_iota(jnp.int32, (T, T), 1)
    causal = ki <= qi
    scale = jnp.float32(1.0 / math.sqrt(head_dim))

    for hh in range(n_head):
        lo = hh * head_dim
        hi = lo + head_dim
        q = qkv[:, lo:hi]
        k = qkv[:, C + lo:C + hi]
        v = qkv[:, 2 * C + lo:2 * C + hi]
        # scores: contract head_dim of q and k directly (no explicit k.T)
        s = lax.dot_general(q.astype(BF16), k.astype(BF16),
                            (((1,), (1,)), ((), ())),
                            preferred_element_type=F32) * scale
        s = jnp.where(causal, s, jnp.float32(-1e30))          # fp32 mask
        m = jnp.max(s, axis=-1, keepdims=True)
        p = jnp.exp(s - m)
        p = p * pl.reciprocal(jnp.sum(p, axis=-1, keepdims=True), approx=True)
        # Stage the head output into the (T, C) scratch slab: no per-head
        # projection dots, no accumulator vregs carried across heads.
        y_scr[:, lo:hi] = jnp.dot(p.astype(BF16), v.astype(BF16),
                                  preferred_element_type=F32)
    # Single full-K output projection (T, C) @ (C, C) on the MXU.
    attn = jnp.dot(y_scr[...].astype(BF16), wproj[0],
                   preferred_element_type=F32) + bproj[0]
    x = x + attn

    # ---- MLP branch: LN2 -> fc -> GELU(tanh) -> proj -> residual ----
    if not skip_mlp:
        h2 = _ln(x, ln2_g[0], ln2_b[0])
        mid = jnp.dot(h2.astype(BF16), wfc[0],
                      preferred_element_type=F32) + bfc[0]    # (T, 4C) fp32
        c = jnp.float32(0.7978845608028654)                   # sqrt(2/pi)
        mid = 0.5 * mid * (1.0 + jnp.tanh(c * (mid + 0.044715 * mid * mid * mid)))
        x = x + jnp.dot(mid.astype(BF16), wmp[0],
                        preferred_element_type=F32) + bmp[0]

    xo_ref[0] = x

    # ---- fused consensus epilogue (x already VMEM-resident) ----
    y = _ln(x, lnf_g[...], lnf_b[...])
    # faithful to torch: no epsilon in the row-norm (torch.div by norm)
    inv = lax.rsqrt(jnp.sum(y * y, axis=-1, keepdims=True))
    y1 = y * inv
    # fp32 gram: it is returned verbatim as err2, not just reduced to a stat.
    gram = lax.dot_general(y1, y1, (((1,), (1,)), ((), ())),
                           preferred_element_type=F32)        # (T, T)
    gram_ref[0, 0, 0] = gram
    aux_ref[0, 0, 0] = jnp.mean(jnp.abs(gram[0:1, :]), axis=-1, keepdims=True)
    gmean_ref[0, 0, 0] = jnp.mean(gram, keepdims=True)


def _lnf_lmhead_kernel(x_ref, g_ref, b_ref, wte_ref, o_ref):
    """Fused final LayerNorm + tied lm_head tile: out = ln_f(x) @ wte^T.
    wte is consumed directly as (tv, C) bf16 — no transpose is materialized."""
    y = _ln(x_ref[...], g_ref[...], b_ref[...])               # (tm, C)
    o_ref[...] = lax.dot_general(y.astype(BF16), wte_ref[...],
                                 (((1,), (1,)), ((), ())),
                                 preferred_element_type=F32)


# ------------------------------ kernel wrappers ------------------------------

def gpt_stack_forward(params, x, N, n_head, head_dim, skip_mlp):
    """Runs N repetitions of the whole block stack in one pallas_call."""
    B, T, C = x.shape
    L = params['attn_w'].shape[0]
    kernel = partial(_gpt_block_kernel, n_head=n_head, head_dim=head_dim,
                     skip_mlp=skip_mlp)

    batch3 = lambda b, n, l: (b, 0, 0)   # activation: per-batch, layer-resident
    layer3 = lambda b, n, l: (l, 0, 0)   # stacked per-layer weights (next layer
                                         # is prefetched by default 2-deep bufs)
    const2 = lambda b, n, l: (0, 0)      # ln_f params
    step5 = lambda b, n, l: (b, n, l, 0, 0)

    out_shape = (jax.ShapeDtypeStruct((B, T, C), F32),
                 jax.ShapeDtypeStruct((B, N, L, T, T), F32),
                 jax.ShapeDtypeStruct((B, N, L, 1, 1), F32),
                 jax.ShapeDtypeStruct((B, N, L, 1, 1), F32))
    out_specs = (pl.BlockSpec((1, T, C), batch3),
                 pl.BlockSpec((1, 1, 1, T, T), step5),
                 pl.BlockSpec((1, 1, 1, 1, 1), step5),
                 pl.BlockSpec((1, 1, 1, 1, 1), step5))
    in_specs = [
        pl.BlockSpec((1, T, C), batch3),
        pl.BlockSpec((1, 1, C), layer3), pl.BlockSpec((1, 1, C), layer3),
        pl.BlockSpec((1, C, 3 * C), layer3), pl.BlockSpec((1, 1, 3 * C), layer3),
        pl.BlockSpec((1, C, C), layer3), pl.BlockSpec((1, 1, C), layer3),
        pl.BlockSpec((1, 1, C), layer3), pl.BlockSpec((1, 1, C), layer3),
        pl.BlockSpec((1, C, 4 * C), layer3), pl.BlockSpec((1, 1, 4 * C), layer3),
        pl.BlockSpec((1, 4 * C, C), layer3), pl.BlockSpec((1, 1, C), layer3),
        pl.BlockSpec((1, C), const2), pl.BlockSpec((1, C), const2),
    ]
    return pl.pallas_call(
        kernel,
        out_shape=out_shape,
        grid=(B, N, L),
        in_specs=in_specs,
        out_specs=out_specs,
        scratch_shapes=[pltpu.VMEM((T, C), F32)],   # head-output staging slab
        compiler_params=pltpu.CompilerParams(
            dimension_semantics=("parallel", "arbitrary", "arbitrary"),
            vmem_limit_bytes=_vmem_limit_bytes()),
    )(x, params['ln1_g'], params['ln1_b'], params['attn_w'], params['attn_b'],
      params['proj_w'], params['proj_b'], params['ln2_g'], params['ln2_b'],
      params['fc_w'], params['fc_b'], params['mproj_w'], params['mproj_b'],
      params['ln_f_g'], params['ln_f_b'])


def lnf_lm_head(x2d, g, b, wte_bf16):
    M, C = x2d.shape
    V = wte_bf16.shape[0]
    # Pad the vocab axis to a lane multiple so tiles stay lane-dense and the
    # whole (V, C) weight is never loaded into one block (real vocab = 50257).
    V_pad = ((V + 127) // 128) * 128
    if V_pad != V:
        wte_bf16 = jnp.pad(wte_bf16, ((0, V_pad - V), (0, 0)))
    tv = 512 if V_pad % 512 == 0 else 128
    tm = 256 if M % 256 == 0 else M     # M = B*T; full block at tiny configs
    grid = (M // tm, V_pad // tv)
    out = pl.pallas_call(
        _lnf_lmhead_kernel,
        out_shape=jax.ShapeDtypeStruct((M, V_pad), F32),
        grid=grid,
        in_specs=[pl.BlockSpec((tm, C), lambda i, j: (i, 0)),
                  pl.BlockSpec((1, C), lambda i, j: (0, 0)),
                  pl.BlockSpec((1, C), lambda i, j: (0, 0)),
                  pl.BlockSpec((tv, C), lambda i, j: (j, 0))],
        out_specs=pl.BlockSpec((tm, tv), lambda i, j: (i, j)),
        compiler_params=pltpu.CompilerParams(
            dimension_semantics=("parallel", "parallel"),
            vmem_limit_bytes=_vmem_limit_bytes()),
        cost_estimate=pl.CostEstimate(
            flops=2 * M * V_pad * C, transcendentals=0,
            bytes_accessed=4 * M * C + 2 * V_pad * C + 4 * M * V_pad),
    )(x2d, g, b, wte_bf16)
    return out[:, :V]


# ------------------------------ model (glue) --------------------------------

def init_params(key, cfg):
    C = cfg['n_embd']
    V = cfg['vocab_size']
    L = cfg['n_layer']
    ks = jax.random.split(key, 6)

    def nrm(k, shape, dtype=F32):
        return (0.02 * jax.random.normal(k, shape)).astype(dtype)

    params = {
        'wte': nrm(ks[0], (V, C)),                 # fp32 for the embedding gather
        'wpe': nrm(ks[1], (cfg['block_size'], C)),
        'ln_f_g': jnp.ones((1, C), F32),
        'ln_f_b': jnp.zeros((1, C), F32),
        # per-layer weights stacked along a leading layer axis (grid-indexed)
        'ln1_g': jnp.ones((L, 1, C), F32), 'ln1_b': jnp.zeros((L, 1, C), F32),
        'attn_w': nrm(ks[2], (L, C, 3 * C), BF16),
        'attn_b': jnp.zeros((L, 1, 3 * C), F32),
        'proj_w': nrm(ks[3], (L, C, C), BF16),
        'proj_b': jnp.zeros((L, 1, C), F32),
        'ln2_g': jnp.ones((L, 1, C), F32), 'ln2_b': jnp.zeros((L, 1, C), F32),
        'fc_w': nrm(ks[4], (L, C, 4 * C), BF16),
        'fc_b': jnp.zeros((L, 1, 4 * C), F32),
        'mproj_w': nrm(ks[5], (L, 4 * C, C), BF16),
        'mproj_b': jnp.zeros((L, 1, C), F32),
    }
    # bf16 shadow of the tied embedding for the HBM-bandwidth-bound lm_head.
    params['wte_bf16'] = params['wte'].astype(BF16)
    return params


def gpt_forward(params, idx, cfg, N=2, num_prompts=None, skip_mlp=False,
                targets=None):
    B, T = idx.shape
    C = cfg['n_embd']
    H = cfg['n_head']
    hd = C // H
    L = cfg['n_layer']
    num_prompts = B if num_prompts is None else num_prompts
    assert T <= cfg['block_size']

    tok_emb = params['wte'][idx]                       # (B, T, C) gather (glue)
    pos_emb = params['wpe'][:T]                        # (T, C)
    x = (tok_emb + pos_emb[None, :, :]).astype(F32)

    # One fused kernel runs all N repetitions of all layers and emits the
    # per-step consensus reductions.
    x, gram, aux_m, gram_m = gpt_stack_forward(params, x, N, H, hd, skip_mlp)

    logits = lnf_lm_head(x.reshape(B * T, C), params['ln_f_g'],
                         params['ln_f_b'], params['wte_bf16']).reshape(B, T, -1)

    U = N * L                                           # torch: u = iter*L + layer
    err = jnp.concatenate([aux_m.reshape(B, U, 1), gram_m.reshape(B, U, 1)],
                          axis=-1)                      # (B, U, 2)
    err2 = jnp.zeros((num_prompts, T, T, U), F32)
    # torch: err2[0,:,:,u] is overwritten per k, so the last batch element wins
    err2 = err2.at[0].set(jnp.moveaxis(gram[B - 1].reshape(U, T, T), 0, -1))
    # decode_iters=None -> err3 has a zero-length axis (torch hardcodes 50257;
    # we use the synthetic vocab size since the axis is empty anyway).
    err3 = jnp.zeros((num_prompts, 0, T, cfg['vocab_size']), F32)

    loss = None
    if targets is not None:
        V = logits.shape[-1]
        logp = jax.nn.log_softmax(logits.reshape(-1, V), axis=-1)
        loss = -jnp.mean(jnp.take_along_axis(logp, targets.reshape(-1, 1),
                                             axis=-1))
    return logits, loss, err, err2, err3


# --------------------------------- main --------------------------------------

if __name__ == "__main__":
    cfg = dict(block_size=16, vocab_size=64, n_layer=2, n_head=4, n_embd=32)
    B, T, N = 2, 8, 2

    key = jax.random.PRNGKey(0)
    k_params, k_idx = jax.random.split(key)
    params = init_params(k_params, cfg)
    idx = jax.random.randint(k_idx, (B, T), 0, cfg['vocab_size'], dtype=jnp.int32)

    logits, loss, err, err2, err3 = gpt_forward(
        params, idx, cfg, N=N, num_prompts=B, skip_mlp=False, targets=None)
    jax.block_until_ready((logits, err, err2, err3))

    assert logits.shape == (B, T, cfg['vocab_size'])
    assert err.shape == (B, cfg['n_layer'] * N, 2)
    assert err2.shape == (B, T, T, cfg['n_layer'] * N)
    assert err3.shape == (B, 0, T, cfg['vocab_size'])
    assert bool(jnp.all(jnp.isfinite(logits)))
    assert bool(jnp.all(jnp.isfinite(err)))
    assert bool(jnp.all(jnp.isfinite(err2)))
    print("KERNEL_OK")
</pallas_src>

<mosaic_0001>
module attributes {stable_mosaic.version = 11 : i64} {
  func.func @_gpt_block_kernel(%arg0: i32, %arg1: i32, %arg2: i32, %arg3: memref<1x8x32xf32, #tpu.memory_space<vmem>>, %arg4: memref<1x1x32xf32, #tpu.memory_space<vmem>>, %arg5: memref<1x1x32xf32, #tpu.memory_space<vmem>>, %arg6: memref<1x32x96xbf16, #tpu.memory_space<vmem>>, %arg7: memref<1x1x96xf32, #tpu.memory_space<vmem>>, %arg8: memref<1x32x32xbf16, #tpu.memory_space<vmem>>, %arg9: memref<1x1x32xf32, #tpu.memory_space<vmem>>, %arg10: memref<1x1x32xf32, #tpu.memory_space<vmem>>, %arg11: memref<1x1x32xf32, #tpu.memory_space<vmem>>, %arg12: memref<1x32x128xbf16, #tpu.memory_space<vmem>>, %arg13: memref<1x1x128xf32, #tpu.memory_space<vmem>>, %arg14: memref<1x128x32xbf16, #tpu.memory_space<vmem>>, %arg15: memref<1x1x32xf32, #tpu.memory_space<vmem>>, %arg16: memref<1x32xf32, #tpu.memory_space<vmem>>, %arg17: memref<1x32xf32, #tpu.memory_space<vmem>>, %arg18: memref<1x8x32xf32, #tpu.memory_space<vmem>>, %arg19: memref<1x1x1x8x8xf32, #tpu.memory_space<vmem>>, %arg20: memref<1x1x1x1x1xf32, #tpu.memory_space<vmem>>, %arg21: memref<1x1x1x1x1xf32, #tpu.memory_space<vmem>>, %arg22: memref<8x32xf32, #tpu.memory_space<vmem>>) attributes {dimension_semantics = [#tpu.dimension_semantics<parallel>, #tpu.dimension_semantics<arbitrary>, #tpu.dimension_semantics<arbitrary>], iteration_bounds = array<i64: 2, 2, 2>, scalar_prefetch = 0 : i64, scratch_operands = 1 : i64, tpu.core_type = #tpu.core_type<tc>, window_params = [{transform_indices = @transform_0, window_bounds = array<i64: 1, 8, 32>}, {transform_indices = @transform_1, window_bounds = array<i64: 1, 1, 32>}, {transform_indices = @transform_2, window_bounds = array<i64: 1, 1, 32>}, {transform_indices = @transform_3, window_bounds = array<i64: 1, 32, 96>}, {transform_indices = @transform_4, window_bounds = array<i64: 1, 1, 96>}, {transform_indices = @transform_5, window_bounds = array<i64: 1, 32, 32>}, {transform_indices = @transform_6, window_bounds = array<i64: 1, 1, 32>}, {transform_indices = @transform_7, window_bounds = array<i64: 1, 1, 32>}, {transform_indices = @transform_8, window_bounds = array<i64: 1, 1, 32>}, {transform_indices = @transform_9, window_bounds = array<i64: 1, 32, 128>}, {transform_indices = @transform_10, window_bounds = array<i64: 1, 1, 128>}, {transform_indices = @transform_11, window_bounds = array<i64: 1, 128, 32>}, {transform_indices = @transform_12, window_bounds = array<i64: 1, 1, 32>}, {pipeline_mode = #tpu.pipeline_mode<synchronous>, transform_indices = @transform_13, window_bounds = array<i64: 1, 32>}, {pipeline_mode = #tpu.pipeline_mode<synchronous>, transform_indices = @transform_14, window_bounds = array<i64: 1, 32>}, {transform_indices = @transform_15, window_bounds = array<i64: 1, 8, 32>}, {transform_indices = @transform_16, window_bounds = array<i64: 1, 1, 1, 8, 8>}, {transform_indices = @transform_17, window_bounds = array<i64: 1, 1, 1, 1, 1>}, {transform_indices = @transform_18, window_bounds = array<i64: 1, 1, 1, 1, 1>}]} {
    %c0_i32 = arith.constant 0 : i32
    %0 = arith.cmpi eq, %arg1, %c0_i32 : i32
    %c0_i32_0 = arith.constant 0 : i32
    %1 = arith.cmpi eq, %arg2, %c0_i32_0 : i32
    %2 = arith.andi %0, %1 : i1
    %3 = arith.extui %2 : i1 to i32
    %c0_i32_1 = arith.constant 0 : i32
    %4 = arith.cmpi ne, %3, %c0_i32_1 : i32
    scf.if %4 {
      %c0_121 = arith.constant 0 : index
      %c0_122 = arith.constant 0 : index
      %c0_123 = arith.constant 0 : index
      %256 = vector.load %arg3[%c0_121, %c0_122, %c0_123] : memref<1x8x32xf32, #tpu.memory_space<vmem>>, vector<1x8x32xf32>
      %c0_124 = arith.constant 0 : index
      %c0_125 = arith.constant 0 : index
      %c0_126 = arith.constant 0 : index
      %257 = vector.load %arg18[%c0_124, %c0_125, %c0_126] : memref<1x8x32xf32, #tpu.memory_space<vmem>>, vector<1x8x32xf32>
      tpu.vector_store %arg18[%c0_124, %c0_125, %c0_126], %256 {strides = array<i32>} : memref<1x8x32xf32, #tpu.memory_space<vmem>>, vector<1x8x32xf32>,
    } else {
    }
    %c0 = arith.constant 0 : index
    %c0_2 = arith.constant 0 : index
    %c0_3 = arith.constant 0 : index
    %5 = vector.load %arg18[%c0, %c0_2, %c0_3] : memref<1x8x32xf32, #tpu.memory_space<vmem>>, vector<1x8x32xf32>
    %6 = vector.shape_cast %5 : vector<1x8x32xf32> to vector<8x32xf32>
    %c0_4 = arith.constant 0 : index
    %c0_5 = arith.constant 0 : index
    %c0_6 = arith.constant 0 : index
    %7 = vector.load %arg4[%c0_4, %c0_5, %c0_6] : memref<1x1x32xf32, #tpu.memory_space<vmem>>, vector<1x1x32xf32>
    %8 = vector.shape_cast %7 : vector<1x1x32xf32> to vector<1x32xf32>
    %c0_7 = arith.constant 0 : index
    %c0_8 = arith.constant 0 : index
    %c0_9 = arith.constant 0 : index
    %9 = vector.load %arg5[%c0_7, %c0_8, %c0_9] : memref<1x1x32xf32, #tpu.memory_space<vmem>>, vector<1x1x32xf32>
    %10 = vector.shape_cast %9 : vector<1x1x32xf32> to vector<1x32xf32>
    %cst = arith.constant dense<0.000000e+00> : vector<8xf32>
    %11 = vector.multi_reduction <add>, %6, %cst [1] : vector<8x32xf32> to vector<8xf32>
    %12 = vector.shape_cast %11 : vector<8xf32> to vector<8x1xf32>
    %cst_10 = arith.constant 3.200000e+01 : f32
    %13 = vector.broadcast %cst_10 : f32 to vector<8x1xf32>
    %14 = arith.divf %12, %13 : vector<8x1xf32>
    %15 = vector.broadcast %14 : vector<8x1xf32> to vector<8x32xf32>
    %16 = arith.subf %6, %15 : vector<8x32xf32>
    %17 = arith.mulf %16, %16 : vector<8x32xf32>
    %cst_11 = arith.constant dense<0.000000e+00> : vector<8xf32>
    %18 = vector.multi_reduction <add>, %17, %cst_11 [1] : vector<8x32xf32> to vector<8xf32>
    %19 = vector.shape_cast %18 : vector<8xf32> to vector<8x1xf32>
    %cst_12 = arith.constant 3.200000e+01 : f32
    %20 = vector.broadcast %cst_12 : f32 to vector<8x1xf32>
    %21 = arith.divf %19, %20 : vector<8x1xf32>
    %cst_13 = arith.constant 9.99999974E-6 : f32
    %22 = vector.broadcast %cst_13 : f32 to vector<8x1xf32>
    %23 = arith.addf %21, %22 : vector<8x1xf32>
    %24 = math.rsqrt %23 : vector<8x1xf32>
    %25 = vector.broadcast %24 : vector<8x1xf32> to vector<8x32xf32>
    %26 = arith.mulf %16, %25 : vector<8x32xf32>
    %27 = vector.broadcast %8 : vector<1x32xf32> to vector<8x32xf32>
    %28 = arith.mulf %26, %27 : vector<8x32xf32>
    %29 = vector.broadcast %10 : vector<1x32xf32> to vector<8x32xf32>
    %30 = arith.addf %28, %29 : vector<8x32xf32>
    %31 = arith.truncf %30 : vector<8x32xf32> to vector<8x32xbf16>
    %c0_14 = arith.constant 0 : index
    %c0_15 = arith.constant 0 : index
    %c0_16 = arith.constant 0 : index
    %32 = vector.load %arg6[%c0_14, %c0_15, %c0_16] : memref<1x32x96xbf16, #tpu.memory_space<vmem>>, vector<1x32x96xbf16>
    %33 = vector.shape_cast %32 : vector<1x32x96xbf16> to vector<32x96xbf16>
    %cst_17 = arith.constant dense<0.000000e+00> : vector<8x96xf32>
    %34 = tpu.matmul %31, %33, %cst_17 {dimension_numbers = #tpu.dot_dimension_numbers<[1], [0], [0], [1], [0, 0, 1, 1], [], []>} : vector<8x32xbf16>, vector<32x96xbf16>, vector<8x96xf32> -> vector<8x96xf32>
    %c0_18 = arith.constant 0 : index
    %c0_19 = arith.constant 0 : index
    %c0_20 = arith.constant 0 : index
    %35 = vector.load %arg7[%c0_18, %c0_19, %c0_20] : memref<1x1x96xf32, #tpu.memory_space<vmem>>, vector<1x1x96xf32>
    %36 = vector.shape_cast %35 : vector<1x1x96xf32> to vector<1x96xf32>
    %37 = vector.broadcast %36 : vector<1x96xf32> to vector<8x96xf32>
    %38 = arith.addf %34, %37 : vector<8x96xf32>
    %39 = tpu.iota {dimensions = array<i32: 0>} : vector<8x8xi32>
    %40 = tpu.iota {dimensions = array<i32: 1>} : vector<8x8xi32>
    %41 = arith.cmpi sle, %40, %39 : vector<8x8xi32>
    %42 = vector.extract_strided_slice %38 {offsets = [0, 0], sizes = [8, 8], strides = [1, 1]} : vector<8x96xf32> to vector<8x8xf32>
    %43 = vector.extract_strided_slice %38 {offsets = [0, 32], sizes = [8, 8], strides = [1, 1]} : vector<8x96xf32> to vector<8x8xf32>
    %44 = vector.extract_strided_slice %38 {offsets = [0, 64], sizes = [8, 8], strides = [1, 1]} : vector<8x96xf32> to vector<8x8xf32>
    %45 = arith.truncf %42 : vector<8x8xf32> to vector<8x8xbf16>
    %46 = arith.truncf %43 : vector<8x8xf32> to vector<8x8xbf16>
    %cst_21 = arith.constant dense<0.000000e+00> : vector<8x8xf32>
    %47 = tpu.matmul %45, %46, %cst_21 {dimension_numbers = #tpu.dot_dimension_numbers<[1], [1], [0], [0], [0, 0, 1, 0], [], []>} : vector<8x8xbf16>, vector<8x8xbf16>, vector<8x8xf32> -> vector<8x8xf32>
    %cst_22 = arith.constant 0.353553385 : f32
    %48 = vector.broadcast %cst_22 : f32 to vector<8x8xf32>
    %49 = arith.mulf %47, %48 : vector<8x8xf32>
    %cst_23 = arith.constant -1.000000e+30 : f32
    %50 = vector.broadcast %cst_23 : f32 to vector<8x8xf32>
    %51 = arith.select %41, %49, %50 : vector<8x8xi1>, vector<8x8xf32>
    %cst_24 = arith.constant dense<0xFF800000> : vector<8xf32>
    %52 = vector.multi_reduction <maximumf>, %51, %cst_24 [1] : vector<8x8xf32> to vector<8xf32>
    %53 = vector.shape_cast %52 : vector<8xf32> to vector<8x1xf32>
    %54 = vector.broadcast %53 : vector<8x1xf32> to vector<8x8xf32>
    %55 = arith.subf %51, %54 : vector<8x8xf32>
    %56 = math.exp %55 : vector<8x8xf32>
    %cst_25 = arith.constant dense<0.000000e+00> : vector<8xf32>
    %57 = vector.multi_reduction <add>, %56, %cst_25 [1] : vector<8x8xf32> to vector<8xf32>
    %58 = vector.shape_cast %57 : vector<8xf32> to vector<8x1xf32>
    %59 = tpu.reciprocal %58 {approx = true} : vector<8x1xf32> -> vector<8x1xf32>
    %60 = vector.broadcast %59 : vector<8x1xf32> to vector<8x8xf32>
    %61 = arith.mulf %56, %60 : vector<8x8xf32>
    %62 = arith.truncf %61 : vector<8x8xf32> to vector<8x8xbf16>
    %63 = arith.truncf %44 : vector<8x8xf32> to vector<8x8xbf16>
    %cst_26 = arith.constant dense<0.000000e+00> : vector<8x8xf32>
    %64 = tpu.matmul %62, %63, %cst_26 {dimension_numbers = #tpu.dot_dimension_numbers<[1], [0], [0], [1], [0, 0, 1, 1], [], []>} : vector<8x8xbf16>, vector<8x8xbf16>, vector<8x8xf32> -> vector<8x8xf32>
    %c0_27 = arith.constant 0 : index
    %c0_28 = arith.constant 0 : index
    %65 = vector.load %arg22[%c0_27, %c0_28] : memref<8x32xf32, #tpu.memory_space<vmem>>, vector<8x8xf32>
    tpu.vector_store %arg22[%c0_27, %c0_28], %64 {strides = array<i32>} : memref<8x32xf32, #tpu.memory_space<vmem>>, vector<8x8xf32>,
    %66 = vector.extract_strided_slice %38 {offsets = [0, 8], sizes = [8, 8], strides = [1, 1]} : vector<8x96xf32> to vector<8x8xf32>
    %67 = vector.extract_strided_slice %38 {offsets = [0, 40], sizes = [8, 8], strides = [1, 1]} : vector<8x96xf32> to vector<8x8xf32>
    %68 = vector.extract_strided_slice %38 {offsets = [0, 72], sizes = [8, 8], strides = [1, 1]} : vector<8x96xf32> to vector<8x8xf32>
    %69 = arith.truncf %66 : vector<8x8xf32> to vector<8x8xbf16>
    %70 = arith.truncf %67 : vector<8x8xf32> to vector<8x8xbf16>
    %cst_29 = arith.constant dense<0.000000e+00> : vector<8x8xf32>
    %71 = tpu.matmul %69, %70, %cst_29 {dimension_numbers = #tpu.dot_dimension_numbers<[1], [1], [0], [0], [0, 0, 1, 0], [], []>} : vector<8x8xbf16>, vector<8x8xbf16>, vector<8x8xf32> -> vector<8x8xf32>
    %cst_30 = arith.constant 0.353553385 : f32
    %72 = vector.broadcast %cst_30 : f32 to vector<8x8xf32>
    %73 = arith.mulf %71, %72 : vector<8x8xf32>
    %cst_31 = arith.constant -1.000000e+30 : f32
    %74 = vector.broadcast %cst_31 : f32 to vector<8x8xf32>
    %75 = arith.select %41, %73, %74 : vector<8x8xi1>, vector<8x8xf32>
    %cst_32 = arith.constant dense<0xFF800000> : vector<8xf32>
    %76 = vector.multi_reduction <maximumf>, %75, %cst_32 [1] : vector<8x8xf32> to vector<8xf32>
    %77 = vector.shape_cast %76 : vector<8xf32> to vector<8x1xf32>
    %78 = vector.broadcast %77 : vector<8x1xf32> to vector<8x8xf32>
    %79 = arith.subf %75, %78 : vector<8x8xf32>
    %80 = math.exp %79 : vector<8x8xf32>
    %cst_33 = arith.constant dense<0.000000e+00> : vector<8xf32>
    %81 = vector.multi_reduction <add>, %80, %cst_33 [1] : vector<8x8xf32> to vector<8xf32>
    %82 = vector.shape_cast %81 : vector<8xf32> to vector<8x1xf32>
    %83 = tpu.reciprocal %82 {approx = true} : vector<8x1xf32> -> vector<8x1xf32>
    %84 = vector.broadcast %83 : vector<8x1xf32> to vector<8x8xf32>
    %85 = arith.mulf %80, %84 : vector<8x8xf32>
    %86 = arith.truncf %85 : vector<8x8xf32> to vector<8x8xbf16>
    %87 = arith.truncf %68 : vector<8x8xf32> to vector<8x8xbf16>
    %cst_34 = arith.constant dense<0.000000e+00> : vector<8x8xf32>
    %88 = tpu.matmul %86, %87, %cst_34 {dimension_numbers = #tpu.dot_dimension_numbers<[1], [0], [0], [1], [0, 0, 1, 1], [], []>} : vector<8x8xbf16>, vector<8x8xbf16>, vector<8x8xf32> -> vector<8x8xf32>
    %c0_35 = arith.constant 0 : index
    %c8 = arith.constant 8 : index
    %89 = vector.load %arg22[%c0_35, %c8] : memref<8x32xf32, #tpu.memory_space<vmem>>, vector<8x8xf32>
    tpu.vector_store %arg22[%c0_35, %c8], %88 {strides = array<i32>} : memref<8x32xf32, #tpu.memory_space<vmem>>, vector<8x8xf32>,
    %90 = vector.extract_strided_slice %38 {offsets = [0, 16], sizes = [8, 8], strides = [1, 1]} : vector<8x96xf32> to vector<8x8xf32>
    %91 = vector.extract_strided_slice %38 {offsets = [0, 48], sizes = [8, 8], strides = [1, 1]} : vector<8x96xf32> to vector<8x8xf32>
    %92 = vector.extract_strided_slice %38 {offsets = [0, 80], sizes = [8, 8], strides = [1, 1]} : vector<8x96xf32> to vector<8x8xf32>
    %93 = arith.truncf %90 : vector<8x8xf32> to vector<8x8xbf16>
    %94 = arith.truncf %91 : vector<8x8xf32> to vector<8x8xbf16>
    %cst_36 = arith.constant dense<0.000000e+00> : vector<8x8xf32>
    %95 = tpu.matmul %93, %94, %cst_36 {dimension_numbers = #tpu.dot_dimension_numbers<[1], [1], [0], [0], [0, 0, 1, 0], [], []>} : vector<8x8xbf16>, vector<8x8xbf16>, vector<8x8xf32> -> vector<8x8xf32>
    %cst_37 = arith.constant 0.353553385 : f32
    %96 = vector.broadcast %cst_37 : f32 to vector<8x8xf32>
    %97 = arith.mulf %95, %96 : vector<8x8xf32>
    %cst_38 = arith.constant -1.000000e+30 : f32
    %98 = vector.broadcast %cst_38 : f32 to vector<8x8xf32>
    %99 = arith.select %41, %97, %98 : vector<8x8xi1>, vector<8x8xf32>
    %cst_39 = arith.constant dense<0xFF800000> : vector<8xf32>
    %100 = vector.multi_reduction <maximumf>, %99, %cst_39 [1] : vector<8x8xf32> to vector<8xf32>
    %101 = vector.shape_cast %100 : vector<8xf32> to vector<8x1xf32>
    %102 = vector.broadcast %101 : vector<8x1xf32> to vector<8x8xf32>
    %103 = arith.subf %99, %102 : vector<8x8xf32>
    %104 = math.exp %103 : vector<8x8xf32>
    %cst_40 = arith.constant dense<0.000000e+00> : vector<8xf32>
    %105 = vector.multi_reduction <add>, %104, %cst_40 [1] : vector<8x8xf32> to vector<8xf32>
    %106 = vector.shape_cast %105 : vector<8xf32> to vector<8x1xf32>
    %107 = tpu.reciprocal %106 {approx = true} : vector<8x1xf32> -> vector<8x1xf32>
    %108 = vector.broadcast %107 : vector<8x1xf32> to vector<8x8xf32>
    %109 = arith.mulf %104, %108 : vector<8x8xf32>
    %110 = arith.truncf %109 : vector<8x8xf32> to vector<8x8xbf16>
    %111 = arith.truncf %92 : vector<8x8xf32> to vector<8x8xbf16>
    %cst_41 = arith.constant dense<0.000000e+00> : vector<8x8xf32>
    %112 = tpu.matmul %110, %111, %cst_41 {dimension_numbers = #tpu.dot_dimension_numbers<[1], [0], [0], [1], [0, 0, 1, 1], [], []>} : vector<8x8xbf16>, vector<8x8xbf16>, vector<8x8xf32> -> vector<8x8xf32>
    %c0_42 = arith.constant 0 : index
    %c16 = arith.constant 16 : index
    %113 = vector.load %arg22[%c0_42, %c16] : memref<8x32xf32, #tpu.memory_space<vmem>>, vector<8x8xf32>
    tpu.vector_store %arg22[%c0_42, %c16], %112 {strides = array<i32>} : memref<8x32xf32, #tpu.memory_space<vmem>>, vector<8x8xf32>,
    %114 = vector.extract_strided_slice %38 {offsets = [0, 24], sizes = [8, 8], strides = [1, 1]} : vector<8x96xf32> to vector<8x8xf32>
    %115 = vector.extract_strided_slice %38 {offsets = [0, 56], sizes = [8, 8], strides = [1, 1]} : vector<8x96xf32> to vector<8x8xf32>
    %116 = vector.extract_strided_slice %38 {offsets = [0, 88], sizes = [8, 8], strides = [1, 1]} : vector<8x96xf32> to vector<8x8xf32>
    %117 = arith.truncf %114 : vector<8x8xf32> to vector<8x8xbf16>
    %118 = arith.truncf %115 : vector<8x8xf32> to vector<8x8xbf16>
    %cst_43 = arith.constant dense<0.000000e+00> : vector<8x8xf32>
    %119 = tpu.matmul %117, %118, %cst_43 {dimension_numbers = #tpu.dot_dimension_numbers<[1], [1], [0], [0], [0, 0, 1, 0], [], []>} : vector<8x8xbf16>, vector<8x8xbf16>, vector<8x8xf32> -> vector<8x8xf32>
    %cst_44 = arith.constant 0.353553385 : f32
    %120 = vector.broadcast %cst_44 : f32 to vector<8x8xf32>
    %121 = arith.mulf %119, %120 : vector<8x8xf32>
    %cst_45 = arith.constant -1.000000e+30 : f32
    %122 = vector.broadcast %cst_45 : f32 to vector<8x8xf32>
    %123 = arith.select %41, %121, %122 : vector<8x8xi1>, vector<8x8xf32>
    %cst_46 = arith.constant dense<0xFF800000> : vector<8xf32>
    %124 = vector.multi_reduction <maximumf>, %123, %cst_46 [1] : vector<8x8xf32> to vector<8xf32>
    %125 = vector.shape_cast %124 : vector<8xf32> to vector<8x1xf32>
    %126 = vector.broadcast %125 : vector<8x1xf32> to vector<8x8xf32>
    %127 = arith.subf %123, %126 : vector<8x8xf32>
    %128 = math.exp %127 : vector<8x8xf32>
    %cst_47 = arith.constant dense<0.000000e+00> : vector<8xf32>
    %129 = vector.multi_reduction <add>, %128, %cst_47 [1] : vector<8x8xf32> to vector<8xf32>
    %130 = vector.shape_cast %129 : vector<8xf32> to vector<8x1xf32>
    %131 = tpu.reciprocal %130 {approx = true} : vector<8x1xf32> -> vector<8x1xf32>
    %132 = vector.broadcast %131 : vector<8x1xf32> to vector<8x8xf32>
    %133 = arith.mulf %128, %132 : vector<8x8xf32>
    %134 = arith.truncf %133 : vector<8x8xf32> to vector<8x8xbf16>
    %135 = arith.truncf %116 : vector<8x8xf32> to vector<8x8xbf16>
    %cst_48 = arith.constant dense<0.000000e+00> : vector<8x8xf32>
    %136 = tpu.matmul %134, %135, %cst_48 {dimension_numbers = #tpu.dot_dimension_numbers<[1], [0], [0], [1], [0, 0, 1, 1], [], []>} : vector<8x8xbf16>, vector<8x8xbf16>, vector<8x8xf32> -> vector<8x8xf32>
    %c0_49 = arith.constant 0 : index
    %c24 = arith.constant 24 : index
    %137 = vector.load %arg22[%c0_49, %c24] : memref<8x32xf32, #tpu.memory_space<vmem>>, vector<8x8xf32>
    tpu.vector_store %arg22[%c0_49, %c24], %136 {strides = array<i32>} : memref<8x32xf32, #tpu.memory_space<vmem>>, vector<8x8xf32>,
    %c0_50 = arith.constant 0 : index
    %c0_51 = arith.constant 0 : index
    %138 = vector.load %arg22[%c0_50, %c0_51] : memref<8x32xf32, #tpu.memory_space<vmem>>, vector<8x32xf32>
    %139 = arith.truncf %138 : vector<8x32xf32> to vector<8x32xbf16>
    %c0_52 = arith.constant 0 : index
    %c0_53 = arith.constant 0 : index
    %c0_54 = arith.constant 0 : index
    %140 = vector.load %arg8[%c0_52, %c0_53, %c0_54] : memref<1x32x32xbf16, #tpu.memory_space<vmem>>, vector<1x32x32xbf16>
    %141 = vector.shape_cast %140 : vector<1x32x32xbf16> to vector<32x32xbf16>
    %cst_55 = arith.constant dense<0.000000e+00> : vector<8x32xf32>
    %142 = tpu.matmul %139, %141, %cst_55 {dimension_numbers = #tpu.dot_dimension_numbers<[1], [0], [0], [1], [0, 0, 1, 1], [], []>} : vector<8x32xbf16>, vector<32x32xbf16>, vector<8x32xf32> -> vector<8x32xf32>
    %c0_56 = arith.constant 0 : index
    %c0_57 = arith.constant 0 : index
    %c0_58 = arith.constant 0 : index
    %143 = vector.load %arg9[%c0_56, %c0_57, %c0_58] : memref<1x1x32xf32, #tpu.memory_space<vmem>>, vector<1x1x32xf32>
    %144 = vector.shape_cast %143 : vector<1x1x32xf32> to vector<1x32xf32>
    %145 = vector.broadcast %144 : vector<1x32xf32> to vector<8x32xf32>
    %146 = arith.addf %142, %145 : vector<8x32xf32>
    %147 = arith.addf %6, %146 : vector<8x32xf32>
    %c0_59 = arith.constant 0 : index
    %c0_60 = arith.constant 0 : index
    %c0_61 = arith.constant 0 : index
    %148 = vector.load %arg10[%c0_59, %c0_60, %c0_61] : memref<1x1x32xf32, #tpu.memory_space<vmem>>, vector<1x1x32xf32>
    %149 = vector.shape_cast %148 : vector<1x1x32xf32> to vector<1x32xf32>
    %c0_62 = arith.constant 0 : index
    %c0_63 = arith.constant 0 : index
    %c0_64 = arith.constant 0 : index
    %150 = vector.load %arg11[%c0_62, %c0_63, %c0_64] : memref<1x1x32xf32, #tpu.memory_space<vmem>>, vector<1x1x32xf32>
    %151 = vector.shape_cast %150 : vector<1x1x32xf32> to vector<1x32xf32>
    %cst_65 = arith.constant dense<0.000000e+00> : vector<8xf32>
    %152 = vector.multi_reduction <add>, %147, %cst_65 [1] : vector<8x32xf32> to vector<8xf32>
    %153 = vector.shape_cast %152 : vector<8xf32> to vector<8x1xf32>
    %cst_66 = arith.constant 3.200000e+01 : f32
    %154 = vector.broadcast %cst_66 : f32 to vector<8x1xf32>
    %155 = arith.divf %153, %154 : vector<8x1xf32>
    %156 = vector.broadcast %155 : vector<8x1xf32> to vector<8x32xf32>
    %157 = arith.subf %147, %156 : vector<8x32xf32>
    %158 = arith.mulf %157, %157 : vector<8x32xf32>
    %cst_67 = arith.constant dense<0.000000e+00> : vector<8xf32>
    %159 = vector.multi_reduction <add>, %158, %cst_67 [1] : vector<8x32xf32> to vector<8xf32>
    %160 = vector.shape_cast %159 : vector<8xf32> to vector<8x1xf32>
    %cst_68 = arith.constant 3.200000e+01 : f32
    %161 = vector.broadcast %cst_68 : f32 to vector<8x1xf32>
    %162 = arith.divf %160, %161 : vector<8x1xf32>
    %cst_69 = arith.constant 9.99999974E-6 : f32
    %163 = vector.broadcast %cst_69 : f32 to vector<8x1xf32>
    %164 = arith.addf %162, %163 : vector<8x1xf32>
    %165 = math.rsqrt %164 : vector<8x1xf32>
    %166 = vector.broadcast %165 : vector<8x1xf32> to vector<8x32xf32>
    %167 = arith.mulf %157, %166 : vector<8x32xf32>
    %168 = vector.broadcast %149 : vector<1x32xf32> to vector<8x32xf32>
    %169 = arith.mulf %167, %168 : vector<8x32xf32>
    %170 = vector.broadcast %151 : vector<1x32xf32> to vector<8x32xf32>
    %171 = arith.addf %169, %170 : vector<8x32xf32>
    %172 = arith.truncf %171 : vector<8x32xf32> to vector<8x32xbf16>
    %c0_70 = arith.constant 0 : index
    %c0_71 = arith.constant 0 : index
    %c0_72 = arith.constant 0 : index
    %173 = vector.load %arg12[%c0_70, %c0_71, %c0_72] : memref<1x32x128xbf16, #tpu.memory_space<vmem>>, vector<1x32x128xbf16>
    %174 = vector.shape_cast %173 : vector<1x32x128xbf16> to vector<32x128xbf16>
    %cst_73 = arith.constant dense<0.000000e+00> : vector<8x128xf32>
    %175 = tpu.matmul %172, %174, %cst_73 {dimension_numbers = #tpu.dot_dimension_numbers<[1], [0], [0], [1], [0, 0, 1, 1], [], []>} : vector<8x32xbf16>, vector<32x128xbf16>, vector<8x128xf32> -> vector<8x128xf32>
    %c0_74 = arith.constant 0 : index
    %c0_75 = arith.constant 0 : index
    %c0_76 = arith.constant 0 : index
    %176 = vector.load %arg13[%c0_74, %c0_75, %c0_76] : memref<1x1x128xf32, #tpu.memory_space<vmem>>, vector<1x1x128xf32>
    %177 = vector.shape_cast %176 : vector<1x1x128xf32> to vector<1x128xf32>
    %178 = vector.broadcast %177 : vector<1x128xf32> to vector<8x128xf32>
    %179 = arith.addf %175, %178 : vector<8x128xf32>
    %cst_77 = arith.constant 5.000000e-01 : f32
    %180 = vector.broadcast %cst_77 : f32 to vector<8x128xf32>
    %181 = arith.mulf %180, %179 : vector<8x128xf32>
    %cst_78 = arith.constant 4.471500e-02 : f32
    %182 = vector.broadcast %cst_78 : f32 to vector<8x128xf32>
    %183 = arith.mulf %182, %179 : vector<8x128xf32>
    %184 = arith.mulf %183, %179 : vector<8x128xf32>
    %185 = arith.mulf %184, %179 : vector<8x128xf32>
    %186 = arith.addf %179, %185 : vector<8x128xf32>
    %cst_79 = arith.constant 0.797884583 : f32
    %187 = vector.broadcast %cst_79 : f32 to vector<8x128xf32>
    %188 = arith.mulf %187, %186 : vector<8x128xf32>
    %189 = math.tanh %188 : vector<8x128xf32>
    %cst_80 = arith.constant 1.000000e+00 : f32
    %190 = vector.broadcast %cst_80 : f32 to vector<8x128xf32>
    %191 = arith.addf %190, %189 : vector<8x128xf32>
    %192 = arith.mulf %181, %191 : vector<8x128xf32>
    %193 = arith.truncf %192 : vector<8x128xf32> to vector<8x128xbf16>
    %c0_81 = arith.constant 0 : index
    %c0_82 = arith.constant 0 : index
    %c0_83 = arith.constant 0 : index
    %194 = vector.load %arg14[%c0_81, %c0_82, %c0_83] : memref<1x128x32xbf16, #tpu.memory_space<vmem>>, vector<1x128x32xbf16>
    %195 = vector.shape_cast %194 : vector<1x128x32xbf16> to vector<128x32xbf16>
    %cst_84 = arith.constant dense<0.000000e+00> : vector<8x32xf32>
    %196 = tpu.matmul %193, %195, %cst_84 {dimension_numbers = #tpu.dot_dimension_numbers<[1], [0], [0], [1], [0, 0, 1, 1], [], []>} : vector<8x128xbf16>, vector<128x32xbf16>, vector<8x32xf32> -> vector<8x32xf32>
    %197 = arith.addf %147, %196 : vector<8x32xf32>
    %c0_85 = arith.constant 0 : index
    %c0_86 = arith.constant 0 : index
    %c0_87 = arith.constant 0 : index
    %198 = vector.load %arg15[%c0_85, %c0_86, %c0_87] : memref<1x1x32xf32, #tpu.memory_space<vmem>>, vector<1x1x32xf32>
    %199 = vector.shape_cast %198 : vector<1x1x32xf32> to vector<1x32xf32>
    %200 = vector.broadcast %199 : vector<1x32xf32> to vector<8x32xf32>
    %201 = arith.addf %197, %200 : vector<8x32xf32>
    %c0_88 = arith.constant 0 : index
    %c0_89 = arith.constant 0 : index
    %c0_90 = arith.constant 0 : index
    %202 = vector.load %arg18[%c0_88, %c0_89, %c0_90] : memref<1x8x32xf32, #tpu.memory_space<vmem>>, vector<1x8x32xf32>
    %203 = vector.shape_cast %202 : vector<1x8x32xf32> to vector<8x32xf32>
    %204 = vector.shape_cast %201 : vector<8x32xf32> to vector<1x8x32xf32>
    tpu.vector_store %arg18[%c0_88, %c0_89, %c0_90], %204 {strides = array<i32>} : memref<1x8x32xf32, #tpu.memory_space<vmem>>, vector<1x8x32xf32>,
    %c0_91 = arith.constant 0 : index
    %c0_92 = arith.constant 0 : index
    %205 = vector.load %arg16[%c0_91, %c0_92] : memref<1x32xf32, #tpu.memory_space<vmem>>, vector<1x32xf32>
    %c0_93 = arith.constant 0 : index
    %c0_94 = arith.constant 0 : index
    %206 = vector.load %arg17[%c0_93, %c0_94] : memref<1x32xf32, #tpu.memory_space<vmem>>, vector<1x32xf32>
    %cst_95 = arith.constant dense<0.000000e+00> : vector<8xf32>
    %207 = vector.multi_reduction <add>, %201, %cst_95 [1] : vector<8x32xf32> to vector<8xf32>
    %208 = vector.shape_cast %207 : vector<8xf32> to vector<8x1xf32>
    %cst_96 = arith.constant 3.200000e+01 : f32
    %209 = vector.broadcast %cst_96 : f32 to vector<8x1xf32>
    %210 = arith.divf %208, %209 : vector<8x1xf32>
    %211 = vector.broadcast %210 : vector<8x1xf32> to vector<8x32xf32>
    %212 = arith.subf %201, %211 : vector<8x32xf32>
    %213 = arith.mulf %212, %212 : vector<8x32xf32>
    %cst_97 = arith.constant dense<0.000000e+00> : vector<8xf32>
    %214 = vector.multi_reduction <add>, %213, %cst_97 [1] : vector<8x32xf32> to vector<8xf32>
    %215 = vector.shape_cast %214 : vector<8xf32> to vector<8x1xf32>
    %cst_98 = arith.constant 3.200000e+01 : f32
    %216 = vector.broadcast %cst_98 : f32 to vector<8x1xf32>
    %217 = arith.divf %215, %216 : vector<8x1xf32>
    %cst_99 = arith.constant 9.99999974E-6 : f32
    %218 = vector.broadcast %cst_99 : f32 to vector<8x1xf32>
    %219 = arith.addf %217, %218 : vector<8x1xf32>
    %220 = math.rsqrt %219 : vector<8x1xf32>
    %221 = vector.broadcast %220 : vector<8x1xf32> to vector<8x32xf32>
    %222 = arith.mulf %212, %221 : vector<8x32xf32>
    %223 = vector.broadcast %205 : vector<1x32xf32> to vector<8x32xf32>
    %224 = arith.mulf %222, %223 : vector<8x32xf32>
    %225 = vector.broadcast %206 : vector<1x32xf32> to vector<8x32xf32>
    %226 = arith.addf %224, %225 : vector<8x32xf32>
    %227 = arith.mulf %226, %226 : vector<8x32xf32>
    %cst_100 = arith.constant dense<0.000000e+00> : vector<8xf32>
    %228 = vector.multi_reduction <add>, %227, %cst_100 [1] : vector<8x32xf32> to vector<8xf32>
    %229 = vector.shape_cast %228 : vector<8xf32> to vector<8x1xf32>
    %230 = math.rsqrt %229 : vector<8x1xf32>
    %231 = vector.broadcast %230 : vector<8x1xf32> to vector<8x32xf32>
    %232 = arith.mulf %226, %231 : vector<8x32xf32>
    %cst_101 = arith.constant dense<0.000000e+00> : vector<8x8xf32>
    %233 = tpu.matmul %232, %232, %cst_101 {dimension_numbers = #tpu.dot_dimension_numbers<[1], [1], [0], [0], [0, 0, 1, 0], [], []>} : vector<8x32xf32>, vector<8x32xf32>, vector<8x8xf32> -> vector<8x8xf32>
    %c0_102 = arith.constant 0 : index
    %c0_103 = arith.constant 0 : index
    %c0_104 = arith.constant 0 : index
    %c0_105 = arith.constant 0 : index
    %c0_106 = arith.constant 0 : index
    %234 = vector.load %arg19[%c0_102, %c0_103, %c0_104, %c0_105, %c0_106] : memref<1x1x1x8x8xf32, #tpu.memory_space<vmem>>, vector<1x1x1x8x8xf32>
    %235 = vector.shape_cast %234 : vector<1x1x1x8x8xf32> to vector<8x8xf32>
    %236 = vector.shape_cast %233 : vector<8x8xf32> to vector<1x1x1x8x8xf32>
    tpu.vector_store %arg19[%c0_102, %c0_103, %c0_104, %c0_105, %c0_106], %236 {strides = array<i32>} : memref<1x1x1x8x8xf32, #tpu.memory_space<vmem>>, vector<1x1x1x8x8xf32>,
    %237 = vector.extract_strided_slice %233 {offsets = [0, 0], sizes = [1, 8], strides = [1, 1]} : vector<8x8xf32> to vector<1x8xf32>
    %238 = math.absf %237 : vector<1x8xf32>
    %cst_107 = arith.constant dense<0.000000e+00> : vector<1xf32>
    %239 = vector.multi_reduction <add>, %238, %cst_107 [1] : vector<1x8xf32> to vector<1xf32>
    %240 = vector.shape_cast %239 : vector<1xf32> to vector<1x1xf32>
    %cst_108 = arith.constant 8.000000e+00 : f32
    %241 = vector.broadcast %cst_108 : f32 to vector<1x1xf32>
    %242 = arith.divf %240, %241 : vector<1x1xf32>
    %c0_109 = arith.constant 0 : index
    %c0_110 = arith.constant 0 : index
    %c0_111 = arith.constant 0 : index
    %c0_112 = arith.constant 0 : index
    %c0_113 = arith.constant 0 : index
    %243 = vector.load %arg20[%c0_109, %c0_110, %c0_111, %c0_112, %c0_113] : memref<1x1x1x1x1xf32, #tpu.memory_space<vmem>>, vector<1x1x1x1x1xf32>
    %244 = vector.shape_cast %243 : vector<1x1x1x1x1xf32> to vector<1x1xf32>
    %245 = vector.shape_cast %242 : vector<1x1xf32> to vector<1x1x1x1x1xf32>
    tpu.vector_store %arg20[%c0_109, %c0_110, %c0_111, %c0_112, %c0_113], %245 {strides = array<i32>} : memref<1x1x1x1x1xf32, #tpu.memory_space<vmem>>, vector<1x1x1x1x1xf32>,
    %246 = vector.shape_cast %233 : vector<8x8xf32> to vector<1x8x8xf32>
    %cst_114 = arith.constant dense<0.000000e+00> : vector<1xf32>
    %247 = vector.multi_reduction <add>, %246, %cst_114 [1, 2] : vector<1x8x8xf32> to vector<1xf32>
    %248 = vector.shape_cast %247 : vector<1xf32> to vector<1x1x1xf32>
    %249 = vector.extract %248[0, 0, 0] : f32 from vector<1x1x1xf32>
    %250 = vector.broadcast %249 : f32 to vector<1x1xf32>
    %cst_115 = arith.constant 6.400000e+01 : f32
    %251 = vector.broadcast %cst_115 : f32 to vector<1x1xf32>
    %252 = arith.divf %250, %251 : vector<1x1xf32>
    %c0_116 = arith.constant 0 : index
    %c0_117 = arith.constant 0 : index
    %c0_118 = arith.constant 0 : index
    %c0_119 = arith.constant 0 : index
    %c0_120 = arith.constant 0 : index
    %253 = vector.load %arg21[%c0_116, %c0_117, %c0_118, %c0_119, %c0_120] : memref<1x1x1x1x1xf32, #tpu.memory_space<vmem>>, vector<1x1x1x1x1xf32>
    %254 = vector.shape_cast %253 : vector<1x1x1x1x1xf32> to vector<1x1xf32>
    %255 = vector.shape_cast %252 : vector<1x1xf32> to vector<1x1x1x1x1xf32>
    tpu.vector_store %arg21[%c0_116, %c0_117, %c0_118, %c0_119, %c0_120], %255 {strides = array<i32>} : memref<1x1x1x1x1xf32, #tpu.memory_space<vmem>>, vector<1x1x1x1x1xf32>,
    return
  }
  func.func @transform_0(%arg0: i32, %arg1: i32, %arg2: i32) -> (i32, i32, i32) {
    %c0_i32 = arith.constant 0 : i32
    %c0_i32_0 = arith.constant 0 : i32
    %c0_i32_1 = arith.constant 0 : i32
    return %arg0, %c0_i32, %c0_i32_0 : i32, i32, i32
  }
  func.func @transform_1(%arg0: i32, %arg1: i32, %arg2: i32) -> (i32, i32, i32) {
    %c0_i32 = arith.constant 0 : i32
    %c0_i32_0 = arith.constant 0 : i32
    %c0_i32_1 = arith.constant 0 : i32
    return %arg2, %c0_i32, %c0_i32_0 : i32, i32, i32
  }
  func.func @transform_2(%arg0: i32, %arg1: i32, %arg2: i32) -> (i32, i32, i32) {
    %c0_i32 = arith.constant 0 : i32
    %c0_i32_0 = arith.constant 0 : i32
    %c0_i32_1 = arith.constant 0 : i32
    return %arg2, %c0_i32, %c0_i32_0 : i32, i32, i32
  }
  func.func @transform_3(%arg0: i32, %arg1: i32, %arg2: i32) -> (i32, i32, i32) {
    %c0_i32 = arith.constant 0 : i32
    %c0_i32_0 = arith.constant 0 : i32
    %c0_i32_1 = arith.constant 0 : i32
    return %arg2, %c0_i32, %c0_i32_0 : i32, i32, i32
  }
  func.func @transform_4(%arg0: i32, %arg1: i32, %arg2: i32) -> (i32, i32, i32) {
    %c0_i32 = arith.constant 0 : i32
    %c0_i32_0 = arith.constant 0 : i32
    %c0_i32_1 = arith.constant 0 : i32
    return %arg2, %c0_i32, %c0_i32_0 : i32, i32, i32
  }
  func.func @transform_5(%arg0: i32, %arg1: i32, %arg2: i32) -> (i32, i32, i32) {
    %c0_i32 = arith.constant 0 : i32
    %c0_i32_0 = arith.constant 0 : i32
    %c0_i32_1 = arith.constant 0 : i32
    return %arg2, %c0_i32, %c0_i32_0 : i32, i32, i32
  }
  func.func @transform_6(%arg0: i32, %arg1: i32, %arg2: i32) -> (i32, i32, i32) {
    %c0_i32 = arith.constant 0 : i32
    %c0_i32_0 = arith.constant 0 : i32
    %c0_i32_1 = arith.constant 0 : i32
    return %arg2, %c0_i32, %c0_i32_0 : i32, i32, i32
  }
  func.func @transform_7(%arg0: i32, %arg1: i32, %arg2: i32) -> (i32, i32, i32) {
    %c0_i32 = arith.constant 0 : i32
    %c0_i32_0 = arith.constant 0 : i32
    %c0_i32_1 = arith.constant 0 : i32
    return %arg2, %c0_i32, %c0_i32_0 : i32, i32, i32
  }
  func.func @transform_8(%arg0: i32, %arg1: i32, %arg2: i32) -> (i32, i32, i32) {
    %c0_i32 = arith.constant 0 : i32
    %c0_i32_0 = arith.constant 0 : i32
    %c0_i32_1 = arith.constant 0 : i32
    return %arg2, %c0_i32, %c0_i32_0 : i32, i32, i32
  }
  func.func @transform_9(%arg0: i32, %arg1: i32, %arg2: i32) -> (i32, i32, i32) {
    %c0_i32 = arith.constant 0 : i32
    %c0_i32_0 = arith.constant 0 : i32
    %c0_i32_1 = arith.constant 0 : i32
    return %arg2, %c0_i32, %c0_i32_0 : i32, i32, i32
  }
  func.func @transform_10(%arg0: i32, %arg1: i32, %arg2: i32) -> (i32, i32, i32) {
    %c0_i32 = arith.constant 0 : i32
    %c0_i32_0 = arith.constant 0 : i32
    %c0_i32_1 = arith.constant 0 : i32
    return %arg2, %c0_i32, %c0_i32_0 : i32, i32, i32
  }
  func.func @transform_11(%arg0: i32, %arg1: i32, %arg2: i32) -> (i32, i32, i32) {
    %c0_i32 = arith.constant 0 : i32
    %c0_i32_0 = arith.constant 0 : i32
    %c0_i32_1 = arith.constant 0 : i32
    return %arg2, %c0_i32, %c0_i32_0 : i32, i32, i32
  }
  func.func @transform_12(%arg0: i32, %arg1: i32, %arg2: i32) -> (i32, i32, i32) {
    %c0_i32 = arith.constant 0 : i32
    %c0_i32_0 = arith.constant 0 : i32
    %c0_i32_1 = arith.constant 0 : i32
    return %arg2, %c0_i32, %c0_i32_0 : i32, i32, i32
  }
  func.func @transform_13(%arg0: i32, %arg1: i32, %arg2: i32) -> (i32, i32) {
    %c0_i32 = arith.constant 0 : i32
    %c0_i32_0 = arith.constant 0 : i32
    %c0_i32_1 = arith.constant 0 : i32
    return %c0_i32, %c0_i32_0 : i32, i32
  }
  func.func @transform_14(%arg0: i32, %arg1: i32, %arg2: i32) -> (i32, i32) {
    %c0_i32 = arith.constant 0 : i32
    %c0_i32_0 = arith.constant 0 : i32
    %c0_i32_1 = arith.constant 0 : i32
    return %c0_i32, %c0_i32_0 : i32, i32
  }
  func.func @transform_15(%arg0: i32, %arg1: i32, %arg2: i32) -> (i32, i32, i32) {
    %c0_i32 = arith.constant 0 : i32
    %c0_i32_0 = arith.constant 0 : i32
    %c0_i32_1 = arith.constant 0 : i32
    return %arg0, %c0_i32, %c0_i32_0 : i32, i32, i32
  }
  func.func @transform_16(%arg0: i32, %arg1: i32, %arg2: i32) -> (i32, i32, i32, i32, i32) {
    %c0_i32 = arith.constant 0 : i32
    %c0_i32_0 = arith.constant 0 : i32
    %c0_i32_1 = arith.constant 0 : i32
    return %arg0, %arg1, %arg2, %c0_i32, %c0_i32_0 : i32, i32, i32, i32, i32
  }
  func.func @transform_17(%arg0: i32, %arg1: i32, %arg2: i32) -> (i32, i32, i32, i32, i32) {
    %c0_i32 = arith.constant 0 : i32
    %c0_i32_0 = arith.constant 0 : i32
    %c0_i32_1 = arith.constant 0 : i32
    return %arg0, %arg1, %arg2, %c0_i32, %c0_i32_0 : i32, i32, i32, i32, i32
  }
  func.func @transform_18(%arg0: i32, %arg1: i32, %arg2: i32) -> (i32, i32, i32, i32, i32) {
    %c0_i32 = arith.constant 0 : i32
    %c0_i32_0 = arith.constant 0 : i32
    %c0_i32_1 = arith.constant 0 : i32
    return %arg0, %arg1, %arg2, %c0_i32, %c0_i32_0 : i32, i32, i32, i32, i32
  }
}

</mosaic_0001>

<llo_original>
// kernel: tpu_custom_call.1
$region0: #{tpu_custom_call.1}
  #allocation0 [shape = 'u32[]', space=smem, size = 0x4, offset = 0x4, fixed_abs, tag = 'smem constant byte address 0x4 - core index']
  #allocation1 [shape = 'u32[144,128]{1,0:T(1,128)}', space=vmem, size = 0x12000, scoped, tag = 'internal scratch']
  #allocation2 [shape = 'f32[8,32]{1,0:T(8,128)}', space=vmem, size = 0x1000, scoped, tag = 'scratch operand']
  %s0 = inlined_call_operand.vmem [shape: f32[2,8,32], index: 0, kind: input, shape index: {}]
  %s1 = inlined_call_operand.vmem [shape: f32[2,1,32], index: 1, kind: input, shape index: {}]
  %s2 = inlined_call_operand.vmem [shape: f32[2,1,32], index: 2, kind: input, shape index: {}]
  %s3 = inlined_call_operand.vmem [shape: bf16[2,32,96], index: 3, kind: input, shape index: {}]
  %s4 = inlined_call_operand.vmem [shape: f32[2,1,96], index: 4, kind: input, shape index: {}]
  %s5 = inlined_call_operand.vmem [shape: bf16[2,32,32], index: 5, kind: input, shape index: {}]
  %s6 = inlined_call_operand.vmem [shape: f32[2,1,32], index: 6, kind: input, shape index: {}]
  %s7 = inlined_call_operand.vmem [shape: f32[2,1,32], index: 7, kind: input, shape index: {}]
  %s8 = inlined_call_operand.vmem [shape: f32[2,1,32], index: 8, kind: input, shape index: {}]
  %s9 = inlined_call_operand.vmem [shape: bf16[2,32,128], index: 9, kind: input, shape index: {}]
  %s10 = inlined_call_operand.vmem [shape: f32[2,1,128], index: 10, kind: input, shape index: {}]
  %s11 = inlined_call_operand.vmem [shape: bf16[2,128,32], index: 11, kind: input, shape index: {}]
  %s12 = inlined_call_operand.vmem [shape: f32[2,1,32], index: 12, kind: input, shape index: {}]
  %s13 = inlined_call_operand.vmem [shape: f32[1,32], index: 13, kind: input, shape index: {}]
  %s14 = inlined_call_operand.vmem [shape: f32[1,32], index: 14, kind: input, shape index: {}]
  %s15 = inlined_call_operand.hbm [shape: f32[2,8,32], index: 15, kind: output, shape index: {0}]
  %s16 = inlined_call_operand.hbm [shape: f32[2,2,2,8,8], index: 16, kind: output, shape index: {1}]
  %s17 = inlined_call_operand.vmem [shape: f32[2,2,2,1,1], index: 17, kind: output, shape index: {2}]
  %s18 = inlined_call_operand.vmem [shape: f32[2,2,2,1,1], index: 18, kind: output, shape index: {3}]
  %19 = xla_tuple %s15, %s16, %s17, %s18
  %s20 = sld [smem:[#allocation0]]
  $region121: #{tpu_custom_call.1} parent=0
    _
  %s22 = ssub.s32 1, %s20
  %s23 = scalar_select 0, %s22, %s20
  $region1: #{tpu_custom_call.1} parent=0
    #allocation3 [shape = 'u8[8192]{0}', space=vmem, size = 0x2000, scoped, tag = 'output window, operand 0']
    #allocation4 [shape = 's32[2]{0}', space=sflag, size = 0x8, scoped, tag = 'scoped memory for tpu_custom_call.1']
    #allocation5 [shape = 'u8[8192]{0}', space=vmem, size = 0x2000, scoped, tag = 'output window, operand 1']
    #allocation6 [shape = 's32[2]{0}', space=sflag, size = 0x8, scoped, tag = 'scoped memory for tpu_custom_call.1']
    %24 = vsyncpa [#allocation4], 0
    %s25 = scalar_lea.sflag [#allocation4], 1
    %26 = vsyncpa %s25, 0
    %27 = vsyncpa [#allocation6], 0
    %s28 = scalar_lea.sflag [#allocation6], 1
    %29 = vsyncpa %s28, 0
    loop: start=0, step=1, limit=10
    $region2: #{tpu_custom_call.1} parent=1 // loop_pre_header
      _
    $region3: #{tpu_custom_call.1} parent=1 // loop_header
      %s31 = sphi 0, %s35
      %p32 = scmp.ge.s32.totalorder %s31, 10
      %s38 = sphi 0, %s57
      %s39 = sphi 0, %s53
      %s40 = sphi 0, %s49
      %s41 = sphi 0, %s38
      %s42 = sphi 0, %s39
      %s43 = sphi 0, %s40
      %s44 = sphi 0, %s41
      %s45 = sphi 0, %s42
      %s46 = sphi 0, %s43
      %s60 = sphi 0, %s62
      %s63 = sphi 0, %s60
      %s64 = sphi 0, %s63
      %s80 = sphi 0, %s64
      %s86 = sphi 0, %s88
      %s89 = sphi 0, %s86
      %s90 = sphi 0, %s89
      %s106 = sphi 0, %s90
      %s112 = sphi 0, %s114
      %s115 = sphi 0, %s112
      %s116 = sphi 0, %s115
      %s132 = sphi 0, %s116
      %s138 = sphi 0, %s140
      %s141 = sphi 0, %s138
      %s142 = sphi 0, %s141
      %s158 = sphi 0, %s142
      %s164 = sphi 0, %s166
      %s167 = sphi 0, %s164
      %s168 = sphi 0, %s167
      %s184 = sphi 0, %s168
      %s190 = sphi 0, %s192
      %s193 = sphi 0, %s190
      %s194 = sphi 0, %s193
      %s210 = sphi 0, %s194
      %s216 = sphi 0, %s218
      %s219 = sphi 0, %s216
      %s220 = sphi 0, %s219
      %s236 = sphi 0, %s220
      %s242 = sphi 0, %s244
      %s245 = sphi 0, %s242
      %s246 = sphi 0, %s245
      %s262 = sphi 0, %s246
      %s268 = sphi 0, %s270
      %s271 = sphi 0, %s268
      %s272 = sphi 0, %s271
      %s288 = sphi 0, %s272
      %s294 = sphi 0, %s296
      %s297 = sphi 0, %s294
      %s298 = sphi 0, %s297
      %s314 = sphi 0, %s298
      %s320 = sphi 0, %s322
      %s323 = sphi 0, %s320
      %s324 = sphi 0, %s323
      %s340 = sphi 0, %s324
      %s346 = sphi 0, %s348
      %s349 = sphi 0, %s346
      %s350 = sphi 0, %s349
      %s366 = sphi 0, %s350
      %s372 = sphi 0, %s374
      %s375 = sphi 0, %s372
      %s376 = sphi 0, %s375
      %s392 = sphi 0, %s376
      %s396 = sphi 0, %s396
      %s398 = sphi 0, %s396
      %s399 = sphi 0, %s398
      %s413 = sphi 0, %s399
      %s417 = sphi 0, %s417
      %s419 = sphi 0, %s417
      %s420 = sphi 0, %s419
      %s434 = sphi 0, %s420
      %s440 = sphi 0, %s442
      %s443 = sphi 0, %s440
      %s444 = sphi 0, %s443
      %s460 = sphi 0, %s444
      %s470 = sphi 0, %s472
      %s473 = sphi 0, %s470
      %s474 = sphi 0, %s473
      %s490 = sphi 0, %s474
      %s500 = sphi 0, %s502
      %s503 = sphi 0, %s500
      %s504 = sphi 0, %s503
      %s520 = sphi 0, %s504
      %s530 = sphi 0, %s532
      %s533 = sphi 0, %s530
      %s534 = sphi 0, %s533
      %s550 = sphi 0, %s534
    $region4: #{tpu_custom_call.1} parent=1 // loop_header_branch
      %34 = sbr.rel (%p32) target = $region8
    $region5: #{tpu_custom_call.1} parent=1 // loop_body
      %s36 = ssub.s32 %s31, 1
      %s37 = ssub.s32 %s31, 2
      %s47 = sadd.s32 1, %s40
      %p48 = scmp.ge.s32.totalorder %s47, 2
      %s49 = scalar_select %p48, 0, %s47
      %s50 = sadd.s32 1, %s39
      %s51 = scalar_select %p48, %s50, %s39
      %p52 = scmp.ge.s32.totalorder %s51, 2
      %s53 = scalar_select %p52, 0, %s51
      %s54 = sadd.s32 1, %s38
      %s55 = scalar_select %p52, %s54, %s38
      %p56 = scmp.ge.s32.totalorder %s55, 2
      %s57 = scalar_select %p56, 0, %s55
      %s58 = ssub.s32 %s38, %s57
      %p59 = scmp.eq.s32.totalorder %s58, 0
      %s61 = sadd.s32 %s60, 1
      %s62 = scalar_select %p59, %s60, %s61
      %p65 = pneg %p59
      %p66 = scmp.eq.s32.totalorder %s31, 7
      %p67 = por %p65, %p66
      %p68 = scmp.ne.s32.totalorder %s60, %s63
      %p69 = scmp.eq.s32.totalorder %s31, 0
      %p70 = por %p68, %p69
      %p71 = scmp.ne.s32.totalorder %s60, %s63
      %p72 = scmp.eq.s32.totalorder %s36, 7
      %p73 = por %p71, %p72
      %p74 = scmp.ne.s32.totalorder %s63, %s64
      %p75 = scmp.eq.s32.totalorder %s36, 0
      %p76 = por %p74, %p75
      %p77 = scmp.ne.s32.totalorder %s63, %s64
      %p78 = scmp.eq.s32.totalorder %s37, 7
      %p79 = por %p77, %p78
      %p81 = scmp.ne.s32.totalorder %s64, %s80
      %p82 = scmp.eq.s32.totalorder %s37, 0
      %p83 = por %p81, %p82
      %s84 = ssub.s32 %s40, %s49
      %p85 = scmp.eq.s32.totalorder %s84, 0
      %s87 = sadd.s32 %s86, 1
      %s88 = scalar_select %p85, %s86, %s87
      %p91 = pneg %p85
      %p92 = scmp.eq.s32.totalorder %s31, 7
      %p93 = por %p91, %p92
      %p94 = scmp.ne.s32.totalorder %s86, %s89
      %p95 = scmp.eq.s32.totalorder %s31, 0
      %p96 = por %p94, %p95
      %p97 = scmp.ne.s32.totalorder %s86, %s89
      %p98 = scmp.eq.s32.totalorder %s36, 7
      %p99 = por %p97, %p98
      %p100 = scmp.ne.s32.totalorder %s89, %s90
      %p101 = scmp.eq.s32.totalorder %s36, 0
      %p102 = por %p100, %p101
      %p103 = scmp.ne.s32.totalorder %s89, %s90
      %p104 = scmp.eq.s32.totalorder %s37, 7
      %p105 = por %p103, %p104
      %p107 = scmp.ne.s32.totalorder %s90, %s106
      %p108 = scmp.eq.s32.totalorder %s37, 0
      %p109 = por %p107, %p108
      %s110 = ssub.s32 %s40, %s49
      %p111 = scmp.eq.s32.totalorder %s110, 0
      %s113 = sadd.s32 %s112, 1
      %s114 = scalar_select %p111, %s112, %s113
      %p117 = pneg %p111
      %p118 = scmp.eq.s32.totalorder %s31, 7
      %p119 = por %p117, %p118
      %p120 = scmp.ne.s32.totalorder %s112, %s115
      %p121 = scmp.eq.s32.totalorder %s31, 0
      %p122 = por %p120, %p121
      %p123 = scmp.ne.s32.totalorder %s112, %s115
      %p124 = scmp.eq.s32.totalorder %s36, 7
      %p125 = por %p123, %p124
      %p126 = scmp.ne.s32.totalorder %s115, %s116
      %p127 = scmp.eq.s32.totalorder %s36, 0
      %p128 = por %p126, %p127
      %p129 = scmp.ne.s32.totalorder %s115, %s116
      %p130 = scmp.eq.s32.totalorder %s37, 7
      %p131 = por %p129, %p130
      %p133 = scmp.ne.s32.totalorder %s116, %s132
      %p134 = scmp.eq.s32.totalorder %s37, 0
      %p135 = por %p133, %p134
      %s136 = ssub.s32 %s40, %s49
      %p137 = scmp.eq.s32.totalorder %s136, 0
      %s139 = sadd.s32 %s138, 1
      %s140 = scalar_select %p137, %s138, %s139
      %p143 = pneg %p137
      %p144 = scmp.eq.s32.totalorder %s31, 7
      %p145 = por %p143, %p144
      %p146 = scmp.ne.s32.totalorder %s138, %s141
      %p147 = scmp.eq.s32.totalorder %s31, 0
      %p148 = por %p146, %p147
      %p149 = scmp.ne.s32.totalorder %s138, %s141
      %p150 = scmp.eq.s32.totalorder %s36, 7
      %p151 = por %p149, %p150
      %p152 = scmp.ne.s32.totalorder %s141, %s142
      %p153 = scmp.eq.s32.totalorder %s36, 0
      %p154 = por %p152, %p153
      %p155 = scmp.ne.s32.totalorder %s141, %s142
      %p156 = scmp.eq.s32.totalorder %s37, 7
      %p157 = por %p155, %p156
      %p159 = scmp.ne.s32.totalorder %s142, %s158
      %p160 = scmp.eq.s32.totalorder %s37, 0
      %p161 = por %p159, %p160
      %s162 = ssub.s32 %s40, %s49
      %p163 = scmp.eq.s32.totalorder %s162, 0
      %s165 = sadd.s32 %s164, 1
      %s166 = scalar_select %p163, %s164, %s165
      %p169 = pneg %p163
      %p170 = scmp.eq.s32.totalorder %s31, 7
      %p171 = por %p169, %p170
      %p172 = scmp.ne.s32.totalorder %s164, %s167
      %p173 = scmp.eq.s32.totalorder %s31, 0
      %p174 = por %p172, %p173
      %p175 = scmp.ne.s32.totalorder %s164, %s167
      %p176 = scmp.eq.s32.totalorder %s36, 7
      %p177 = por %p175, %p176
      %p178 = scmp.ne.s32.totalorder %s167, %s168
      %p179 = scmp.eq.s32.totalorder %s36, 0
      %p180 = por %p178, %p179
      %p181 = scmp.ne.s32.totalorder %s167, %s168
      %p182 = scmp.eq.s32.totalorder %s37, 7
      %p183 = por %p181, %p182
      %p185 = scmp.ne.s32.totalorder %s168, %s184
      %p186 = scmp.eq.s32.totalorder %s37, 0
      %p187 = por %p185, %p186
      %s188 = ssub.s32 %s40, %s49
      %p189 = scmp.eq.s32.totalorder %s188, 0
      %s191 = sadd.s32 %s190, 1
      %s192 = scalar_select %p189, %s190, %s191
      %p195 = pneg %p189
      %p196 = scmp.eq.s32.totalorder %s31, 7
      %p197 = por %p195, %p196
      %p198 = scmp.ne.s32.totalorder %s190, %s193
      %p199 = scmp.eq.s32.totalorder %s31, 0
      %p200 = por %p198, %p199
      %p201 = scmp.ne.s32.totalorder %s190, %s193
      %p202 = scmp.eq.s32.totalorder %s36, 7
      %p203 = por %p201, %p202
      %p204 = scmp.ne.s32.totalorder %s193, %s194
      %p205 = scmp.eq.s32.totalorder %s36, 0
      %p206 = por %p204, %p205
      %p207 = scmp.ne.s32.totalorder %s193, %s194
      %p208 = scmp.eq.s32.totalorder %s37, 7
      %p209 = por %p207, %p208
      %p211 = scmp.ne.s32.totalorder %s194, %s210
      %p212 = scmp.eq.s32.totalorder %s37, 0
      %p213 = por %p211, %p212
      %s214 = ssub.s32 %s40, %s49
      %p215 = scmp.eq.s32.totalorder %s214, 0
      %s217 = sadd.s32 %s216, 1
      %s218 = scalar_select %p215, %s216, %s217
      %p221 = pneg %p215
      %p222 = scmp.eq.s32.totalorder %s31, 7
      %p223 = por %p221, %p222
      %p224 = scmp.ne.s32.totalorder %s216, %s219
      %p225 = scmp.eq.s32.totalorder %s31, 0
      %p226 = por %p224, %p225
      %p227 = scmp.ne.s32.totalorder %s216, %s219
      %p228 = scmp.eq.s32.totalorder %s36, 7
      %p229 = por %p227, %p228
      %p230 = scmp.ne.s32.totalorder %s219, %s220
      %p231 = scmp.eq.s32.totalorder %s36, 0
      %p232 = por %p230, %p231
      %p233 = scmp.ne.s32.totalorder %s219, %s220
      %p234 = scmp.eq.s32.totalorder %s37, 7
      %p235 = por %p233, %p234
      %p237 = scmp.ne.s32.totalorder %s220, %s236
      %p238 = scmp.eq.s32.totalorder %s37, 0
      %p239 = por %p237, %p238
      %s240 = ssub.s32 %s40, %s49
      %p241 = scmp.eq.s32.totalorder %s240, 0
      %s243 = sadd.s32 %s242, 1
      %s244 = scalar_select %p241, %s242, %s243
      %p247 = pneg %p241
      %p248 = scmp.eq.s32.totalorder %s31, 7
      %p249 = por %p247, %p248
      %p250 = scmp.ne.s32.totalorder %s242, %s245
      %p251 = scmp.eq.s32.totalorder %s31, 0
      %p252 = por %p250, %p251
      %p253 = scmp.ne.s32.totalorder %s242, %s245
      %p254 = scmp.eq.s32.totalorder %s36, 7
      %p255 = por %p253, %p254
      %p256 = scmp.ne.s32.totalorder %s245, %s246
      %p257 = scmp.eq.s32.totalorder %s36, 0
      %p258 = por %p256, %p257
      %p259 = scmp.ne.s32.totalorder %s245, %s246
      %p260 = scmp.eq.s32.totalorder %s37, 7
      %p261 = por %p259, %p260
      %p263 = scmp.ne.s32.totalorder %s246, %s262
      %p264 = scmp.eq.s32.totalorder %s37, 0
      %p265 = por %p263, %p264
      %s266 = ssub.s32 %s40, %s49
      %p267 = scmp.eq.s32.totalorder %s266, 0
      %s269 = sadd.s32 %s268, 1
      %s270 = scalar_select %p267, %s268, %s269
      %p273 = pneg %p267
      %p274 = scmp.eq.s32.totalorder %s31, 7
      %p275 = por %p273, %p274
      %p276 = scmp.ne.s32.totalorder %s268, %s271
      %p277 = scmp.eq.s32.totalorder %s31, 0
      %p278 = por %p276, %p277
      %p279 = scmp.ne.s32.totalorder %s268, %s271
      %p280 = scmp.eq.s32.totalorder %s36, 7
      %p281 = por %p279, %p280
      %p282 = scmp.ne.s32.totalorder %s271, %s272
      %p283 = scmp.eq.s32.totalorder %s36, 0
      %p284 = por %p282, %p283
      %p285 = scmp.ne.s32.totalorder %s271, %s272
      %p286 = scmp.eq.s32.totalorder %s37, 7
      %p287 = por %p285, %p286
      %p289 = scmp.ne.s32.totalorder %s272, %s288
      %p290 = scmp.eq.s32.totalorder %s37, 0
      %p291 = por %p289, %p290
      %s292 = ssub.s32 %s40, %s49
      %p293 = scmp.eq.s32.totalorder %s292, 0
      %s295 = sadd.s32 %s294, 1
      %s296 = scalar_select %p293, %s294, %s295
      %p299 = pneg %p293
      %p300 = scmp.eq.s32.totalorder %s31, 7
      %p301 = por %p299, %p300
      %p302 = scmp.ne.s32.totalorder %s294, %s297
      %p303 = scmp.eq.s32.totalorder %s31, 0
      %p304 = por %p302, %p303
      %p305 = scmp.ne.s32.totalorder %s294, %s297
      %p306 = scmp.eq.s32.totalorder %s36, 7
      %p307 = por %p305, %p306
      %p308 = scmp.ne.s32.totalorder %s297, %s298
      %p309 = scmp.eq.s32.totalorder %s36, 0
      %p310 = por %p308, %p309
      %p311 = scmp.ne.s32.totalorder %s297, %s298
      %p312 = scmp.eq.s32.totalorder %s37, 7
      %p313 = por %p311, %p312
      %p315 = scmp.ne.s32.totalorder %s298, %s314
      %p316 = scmp.eq.s32.totalorder %s37, 0
      %p317 = por %p315, %p316
      %s318 = ssub.s32 %s40, %s49
      %p319 = scmp.eq.s32.totalorder %s318, 0
      %s321 = sadd.s32 %s320, 1
      %s322 = scalar_select %p319, %s320, %s321
      %p325 = pneg %p319
      %p326 = scmp.eq.s32.totalorder %s31, 7
      %p327 = por %p325, %p326
      %p328 = scmp.ne.s32.totalorder %s320, %s323
      %p329 = scmp.eq.s32.totalorder %s31, 0
      %p330 = por %p328, %p329
      %p331 = scmp.ne.s32.totalorder %s320, %s323
      %p332 = scmp.eq.s32.totalorder %s36, 7
      %p333 = por %p331, %p332
      %p334 = scmp.ne.s32.totalorder %s323, %s324
      %p335 = scmp.eq.s32.totalorder %s36, 0
      %p336 = por %p334, %p335
      %p337 = scmp.ne.s32.totalorder %s323, %s324
      %p338 = scmp.eq.s32.totalorder %s37, 7
      %p339 = por %p337, %p338
      %p341 = scmp.ne.s32.totalorder %s324, %s340
      %p342 = scmp.eq.s32.totalorder %s37, 0
      %p343 = por %p341, %p342
      %s344 = ssub.s32 %s40, %s49
      %p345 = scmp.eq.s32.totalorder %s344, 0
      %s347 = sadd.s32 %s346, 1
      %s348 = scalar_select %p345, %s346, %s347
      %p351 = pneg %p345
      %p352 = scmp.eq.s32.totalorder %s31, 7
      %p353 = por %p351, %p352
      %p354 = scmp.ne.s32.totalorder %s346, %s349
      %p355 = scmp.eq.s32.totalorder %s31, 0
      %p356 = por %p354, %p355
      %p357 = scmp.ne.s32.totalorder %s346, %s349
      %p358 = scmp.eq.s32.totalorder %s36, 7
      %p359 = por %p357, %p358
      %p360 = scmp.ne.s32.totalorder %s349, %s350
      %p361 = scmp.eq.s32.totalorder %s36, 0
      %p362 = por %p360, %p361
      %p363 = scmp.ne.s32.totalorder %s349, %s350
      %p364 = scmp.eq.s32.totalorder %s37, 7
      %p365 = por %p363, %p364
      %p367 = scmp.ne.s32.totalorder %s350, %s366
      %p368 = scmp.eq.s32.totalorder %s37, 0
      %p369 = por %p367, %p368
      %s370 = ssub.s32 %s40, %s49
      %p371 = scmp.eq.s32.totalorder %s370, 0
      %s373 = sadd.s32 %s372, 1
      %s374 = scalar_select %p371, %s372, %s373
      %p377 = pneg %p371
      %p378 = scmp.eq.s32.totalorder %s31, 7
      %p379 = por %p377, %p378
      %p380 = scmp.ne.s32.totalorder %s372, %s375
      %p381 = scmp.eq.s32.totalorder %s31, 0
      %p382 = por %p380, %p381
      %p383 = scmp.ne.s32.totalorder %s372, %s375
      %p384 = scmp.eq.s32.totalorder %s36, 7
      %p385 = por %p383, %p384
      %p386 = scmp.ne.s32.totalorder %s375, %s376
      %p387 = scmp.eq.s32.totalorder %s36, 0
      %p388 = por %p386, %p387
      %p389 = scmp.ne.s32.totalorder %s375, %s376
      %p390 = scmp.eq.s32.totalorder %s37, 7
      %p391 = por %p389, %p390
      %p393 = scmp.ne.s32.totalorder %s376, %s392
      %p394 = scmp.eq.s32.totalorder %s37, 0
      %p395 = por %p393, %p394
      %s397 = sadd.s32 %s396, 1
      %p400 = scmp.eq.s32.totalorder %s31, 7
      %p401 = scmp.ne.s32.totalorder %s396, %s398
      %p402 = scmp.eq.s32.totalorder %s31, 0
      %p403 = por %p401, %p402
      %p404 = scmp.ne.s32.totalorder %s396, %s398
      %p405 = scmp.eq.s32.totalorder %s36, 7
      %p406 = por %p404, %p405
      %p407 = scmp.ne.s32.totalorder %s398, %s399
      %p408 = scmp.eq.s32.totalorder %s36, 0
      %p409 = por %p407, %p408
      %p410 = scmp.ne.s32.totalorder %s398, %s399
      %p411 = scmp.eq.s32.totalorder %s37, 7
      %p412 = por %p410, %p411
      %p414 = scmp.ne.s32.totalorder %s399, %s413
      %p415 = scmp.eq.s32.totalorder %s37, 0
      %p416 = por %p414, %p415
      %s418 = sadd.s32 %s417, 1
      %p421 = scmp.eq.s32.totalorder %s31, 7
      %p422 = scmp.ne.s32.totalorder %s417, %s419
      %p423 = scmp.eq.s32.totalorder %s31, 0
      %p424 = por %p422, %p423
      %p425 = scmp.ne.s32.totalorder %s417, %s419
      %p426 = scmp.eq.s32.totalorder %s36, 7
      %p427 = por %p425, %p426
      %p428 = scmp.ne.s32.totalorder %s419, %s420
      %p429 = scmp.eq.s32.totalorder %s36, 0
      %p430 = por %p428, %p429
      %p431 = scmp.ne.s32.totalorder %s419, %s420
      %p432 = scmp.eq.s32.totalorder %s37, 7
      %p433 = por %p431, %p432
      %p435 = scmp.ne.s32.totalorder %s420, %s434
      %p436 = scmp.eq.s32.totalorder %s37, 0
      %p437 = por %p435, %p436
      %s438 = ssub.s32 %s38, %s57
      %p439 = scmp.eq.s32.totalorder %s438, 0
      %s441 = sadd.s32 %s440, 1
      %s442 = scalar_select %p439, %s440, %s441
      %p445 = pneg %p439
      %p446 = scmp.eq.s32.totalorder %s31, 7
      %p447 = por %p445, %p446
      %p448 = scmp.ne.s32.totalorder %s440, %s443
      %p449 = scmp.eq.s32.totalorder %s31, 0
      %p450 = por %p448, %p449
      %p451 = scmp.ne.s32.totalorder %s440, %s443
      %p452 = scmp.eq.s32.totalorder %s36, 7
      %p453 = por %p451, %p452
      %p454 = scmp.ne.s32.totalorder %s443, %s444
      %p455 = scmp.eq.s32.totalorder %s36, 0
      %p456 = por %p454, %p455
      %p457 = scmp.ne.s32.totalorder %s443, %s444
      %p458 = scmp.eq.s32.totalorder %s37, 7
      %p459 = por %p457, %p458
      %p461 = scmp.ne.s32.totalorder %s444, %s460
      %p462 = scmp.eq.s32.totalorder %s37, 0
      %p463 = por %p461, %p462
      %s464 = ssub.s32 %s38, %s57
      %s465 = ssub.s32 %s39, %s53
      %s466 = sor.u32 %s464, %s465
      %s467 = ssub.s32 %s40, %s49
      %s468 = sor.u32 %s466, %s467
      %p469 = scmp.eq.s32.totalorder %s468, 0
      %s471 = sadd.s32 %s470, 1
      %s472 = scalar_select %p469, %s470, %s471
      %p475 = pneg %p469
      %p476 = scmp.eq.s32.totalorder %s31, 7
      %p477 = por %p475, %p476
      %p478 = scmp.ne.s32.totalorder %s470, %s473
      %p479 = scmp.eq.s32.totalorder %s31, 0
      %p480 = por %p478, %p479
      %p481 = scmp.ne.s32.totalorder %s470, %s473
      %p482 = scmp.eq.s32.totalorder %s36, 7
      %p483 = por %p481, %p482
      %p484 = scmp.ne.s32.totalorder %s473, %s474
      %p485 = scmp.eq.s32.totalorder %s36, 0
      %p486 = por %p484, %p485
      %p487 = scmp.ne.s32.totalorder %s473, %s474
      %p488 = scmp.eq.s32.totalorder %s37, 7
      %p489 = por %p487, %p488
      %p491 = scmp.ne.s32.totalorder %s474, %s490
      %p492 = scmp.eq.s32.totalorder %s37, 0
      %p493 = por %p491, %p492
      %s494 = ssub.s32 %s38, %s57
      %s495 = ssub.s32 %s39, %s53
      %s496 = sor.u32 %s494, %s495
      %s497 = ssub.s32 %s40, %s49
      %s498 = sor.u32 %s496, %s497
      %p499 = scmp.eq.s32.totalorder %s498, 0
      %s501 = sadd.s32 %s500, 1
      %s502 = scalar_select %p499, %s500, %s501
      %p505 = pneg %p499
      %p506 = scmp.eq.s32.totalorder %s31, 7
      %p507 = por %p505, %p506
      %p508 = scmp.ne.s32.totalorder %s500, %s503
      %p509 = scmp.eq.s32.totalorder %s31, 0
      %p510 = por %p508, %p509
      %p511 = scmp.ne.s32.totalorder %s500, %s503
      %p512 = scmp.eq.s32.totalorder %s36, 7
      %p513 = por %p511, %p512
      %p514 = scmp.ne.s32.totalorder %s503, %s504
      %p515 = scmp.eq.s32.totalorder %s36, 0
      %p516 = por %p514, %p515
      %p517 = scmp.ne.s32.totalorder %s503, %s504
      %p518 = scmp.eq.s32.totalorder %s37, 7
      %p519 = por %p517, %p518
      %p521 = scmp.ne.s32.totalorder %s504, %s520
      %p522 = scmp.eq.s32.totalorder %s37, 0
      %p523 = por %p521, %p522
      %s524 = ssub.s32 %s38, %s57
      %s525 = ssub.s32 %s39, %s53
      %s526 = sor.u32 %s524, %s525
      %s527 = ssub.s32 %s40, %s49
      %s528 = sor.u32 %s526, %s527
      %p529 = scmp.eq.s32.totalorder %s528, 0
      %s531 = sadd.s32 %s530, 1
      %s532 = scalar_select %p529, %s530, %s531
      %p535 = pneg %p529
      %p536 = scmp.eq.s32.totalorder %s31, 7
      %p537 = por %p535, %p536
      %p538 = scmp.ne.s32.totalorder %s530, %s533
      %p539 = scmp.eq.s32.totalorder %s31, 0
      %p540 = por %p538, %p539
      %p541 = scmp.ne.s32.totalorder %s530, %s533
      %p542 = scmp.eq.s32.totalorder %s36, 7
      %p543 = por %p541, %p542
      %p544 = scmp.ne.s32.totalorder %s533, %s534
      %p545 = scmp.eq.s32.totalorder %s36, 0
      %p546 = por %p544, %p545
      %p547 = scmp.ne.s32.totalorder %s533, %s534
      %p548 = scmp.eq.s32.totalorder %s37, 7
      %p549 = por %p547, %p548
      %p551 = scmp.ne.s32.totalorder %s534, %s550
      %p552 = scmp.eq.s32.totalorder %s37, 0
      %p553 = por %p551, %p552
      %p554 = scmp.le.s32.totalorder 1, %s31
      %p555 = scmp.lt.s32.totalorder %s31, 9
      %p556 = pnand %p554, %p555
      %p557 = pneg %p556
      // Predicated region
      $region9: #{tpu_custom_call.1} parent=5 // pred_check
        _
      $region10: #{tpu_custom_call.1} parent=5 // pred_check_branch
        %559 = sbr.rel (%p556) target = $region12
      $region11: #{tpu_custom_call.1} parent=5 // pred_region
        %s560 = ssub.s32 %s31, 1
        // Predicated region
        $region13: #{tpu_custom_call.1} parent=11 // pred_check
          %p561 = pneg %p409
        $region14: #{tpu_custom_call.1} parent=11 // pred_check_branch
          %563 = sbr.rel (%p561) target = $region16
        $region15: #{tpu_custom_call.1} parent=11 // pred_region
          _
        $region16: #{tpu_custom_call.1} parent=11 // pred_fallthru
          _
        // Predicated region
        $region17: #{tpu_custom_call.1} parent=11 // pred_check
          %p564 = pneg %p430
        $region18: #{tpu_custom_call.1} parent=11 // pred_check_branch
          %566 = sbr.rel (%p564) target = $region20
        $region19: #{tpu_custom_call.1} parent=11 // pred_region
          _
        $region20: #{tpu_custom_call.1} parent=11 // pred_fallthru
          _
      $region12: #{tpu_custom_call.1} parent=5 // pred_fallthru
        _
      %p567 = scmp.lt.s32.totalorder %s31, 8
      // Predicated region
      $region21: #{tpu_custom_call.1} parent=5 // pred_check
        %p568 = pneg %p567
      $region22: #{tpu_custom_call.1} parent=5 // pred_check_branch
        %570 = sbr.rel (%p568) target = $region24
      $region23: #{tpu_custom_call.1} parent=5 // pred_region
        // Predicated region
        $region25: #{tpu_custom_call.1} parent=23 // pred_check
          %p571 = pneg %p70
        $region26: #{tpu_custom_call.1} parent=23 // pred_check_branch
          %573 = sbr.rel (%p571) target = $region28
        $region27: #{tpu_custom_call.1} parent=23 // pred_region
          %p574 = scmp.lt.s32.totalorder %s38, 1
          %s575 = scalar_select %p574, %s38, 1
          %s576 = smul.addr %s575, 8
          %s577 = scalar_lea.vmem %s0, %s576
        $region28: #{tpu_custom_call.1} parent=23 // pred_fallthru
          _
        // Predicated region
        $region29: #{tpu_custom_call.1} parent=23 // pred_check
          %p578 = pneg %p96
        $region30: #{tpu_custom_call.1} parent=23 // pred_check_branch
          %580 = sbr.rel (%p578) target = $region32
        $region31: #{tpu_custom_call.1} parent=23 // pred_region
          %p581 = scmp.lt.s32.totalorder %s40, 1
          %s582 = scalar_select %p581, %s40, 1
          %s583 = scalar_lea.vmem %s1, %s582
        $region32: #{tpu_custom_call.1} parent=23 // pred_fallthru
          _
        // Predicated region
        $region33: #{tpu_custom_call.1} parent=23 // pred_check
          %p584 = pneg %p122
        $region34: #{tpu_custom_call.1} parent=23 // pred_check_branch
          %586 = sbr.rel (%p584) target = $region36
        $region35: #{tpu_custom_call.1} parent=23 // pred_region
          %p587 = scmp.lt.s32.totalorder %s40, 1
          %s588 = scalar_select %p587, %s40, 1
          %s589 = scalar_lea.vmem %s2, %s588
        $region36: #{tpu_custom_call.1} parent=23 // pred_fallthru
          _
        // Predicated region
        $region37: #{tpu_custom_call.1} parent=23 // pred_check
          %p590 = pneg %p148
        $region38: #{tpu_custom_call.1} parent=23 // pred_check_branch
          %592 = sbr.rel (%p590) target = $region40
        $region39: #{tpu_custom_call.1} parent=23 // pred_region
          %p593 = scmp.lt.s32.totalorder %s40, 1
          %s594 = scalar_select %p593, %s40, 1
          %s595 = smul.addr %s594, 4
          %s596 = smul.addr %s595, 4
          %s597 = scalar_lea.vmem %s3, %s596
        $region40: #{tpu_custom_call.1} parent=23 // pred_fallthru
          _
        // Predicated region
        $region41: #{tpu_custom_call.1} parent=23 // pred_check
          %p598 = pneg %p174
        $region42: #{tpu_custom_call.1} parent=23 // pred_check_branch
          %600 = sbr.rel (%p598) target = $region44
        $region43: #{tpu_custom_call.1} parent=23 // pred_region
          %p601 = scmp.lt.s32.totalorder %s40, 1
          %s602 = scalar_select %p601, %s40, 1
          %s603 = scalar_lea.vmem %s4, %s602
        $region44: #{tpu_custom_call.1} parent=23 // pred_fallthru
          _
        // Predicated region
        $region45: #{tpu_custom_call.1} parent=23 // pred_check
          %p604 = pneg %p200
        $region46: #{tpu_custom_call.1} parent=23 // pred_check_branch
          %606 = sbr.rel (%p604) target = $region48
        $region47: #{tpu_custom_call.1} parent=23 // pred_region
          %p607 = scmp.lt.s32.totalorder %s40, 1
          %s608 = scalar_select %p607, %s40, 1
          %s609 = smul.addr %s608, 4
          %s610 = smul.addr %s609, 4
          %s611 = scalar_lea.vmem %s5, %s610
        $region48: #{tpu_custom_call.1} parent=23 // pred_fallthru
          _
        // Predicated region
        $region49: #{tpu_custom_call.1} parent=23 // pred_check
          %p612 = pneg %p226
        $region50: #{tpu_custom_call.1} parent=23 // pred_check_branch
          %614 = sbr.rel (%p612) target = $region52
        $region51: #{tpu_custom_call.1} parent=23 // pred_region
          %p615 = scmp.lt.s32.totalorder %s40, 1
          %s616 = scalar_select %p615, %s40, 1
          %s617 = scalar_lea.vmem %s6, %s616
        $region52: #{tpu_custom_call.1} parent=23 // pred_fallthru
          _
        // Predicated region
        $region53: #{tpu_custom_call.1} parent=23 // pred_check
          %p618 = pneg %p252
        $region54: #{tpu_custom_call.1} parent=23 // pred_check_branch
          %620 = sbr.rel (%p618) target = $region56
        $region55: #{tpu_custom_call.1} parent=23 // pred_region
          %p621 = scmp.lt.s32.totalorder %s40, 1
          %s622 = scalar_select %p621, %s40, 1
          %s623 = scalar_lea.vmem %s7, %s622
        $region56: #{tpu_custom_call.1} parent=23 // pred_fallthru
          _
        // Predicated region
        $region57: #{tpu_custom_call.1} parent=23 // pred_check
          %p624 = pneg %p278
        $region58: #{tpu_custom_call.1} parent=23 // pred_check_branch
          %626 = sbr.rel (%p624) target = $region60
        $region59: #{tpu_custom_call.1} parent=23 // pred_region
          %p627 = scmp.lt.s32.totalorder %s40, 1
          %s628 = scalar_select %p627, %s40, 1
          %s629 = scalar_lea.vmem %s8, %s628
        $region60: #{tpu_custom_call.1} parent=23 // pred_fallthru
          _
        // Predicated region
        $region61: #{tpu_custom_call.1} parent=23 // pred_check
          %p630 = pneg %p304
        $region62: #{tpu_custom_call.1} parent=23 // pred_check_branch
          %632 = sbr.rel (%p630) target = $region64
        $region63: #{tpu_custom_call.1} parent=23 // pred_region
          %p633 = scmp.lt.s32.totalorder %s40, 1
          %s634 = scalar_select %p633, %s40, 1
          %s635 = smul.addr %s634, 4
          %s636 = smul.addr %s635, 4
          %s637 = scalar_lea.vmem %s9, %s636
        $region64: #{tpu_custom_call.1} parent=23 // pred_fallthru
          _
        // Predicated region
        $region65: #{tpu_custom_call.1} parent=23 // pred_check
          %p638 = pneg %p330
        $region66: #{tpu_custom_call.1} parent=23 // pred_check_branch
          %640 = sbr.rel (%p638) target = $region68
        $region67: #{tpu_custom_call.1} parent=23 // pred_region
          %p641 = scmp.lt.s32.totalorder %s40, 1
          %s642 = scalar_select %p641, %s40, 1
          %s643 = scalar_lea.vmem %s10, %s642
        $region68: #{tpu_custom_call.1} parent=23 // pred_fallthru
          _
        // Predicated region
        $region69: #{tpu_custom_call.1} parent=23 // pred_check
          %p644 = pneg %p356
        $region70: #{tpu_custom_call.1} parent=23 // pred_check_branch
          %646 = sbr.rel (%p644) target = $region72
        $region71: #{tpu_custom_call.1} parent=23 // pred_region
          %p647 = scmp.lt.s32.totalorder %s40, 1
          %s648 = scalar_select %p647, %s40, 1
          %s649 = smul.addr %s648, 16
          %s650 = smul.addr %s649, 4
          %s651 = scalar_lea.vmem %s11, %s650
        $region72: #{tpu_custom_call.1} parent=23 // pred_fallthru
          _
        // Predicated region
        $region73: #{tpu_custom_call.1} parent=23 // pred_check
          %p652 = pneg %p382
        $region74: #{tpu_custom_call.1} parent=23 // pred_check_branch
          %654 = sbr.rel (%p652) target = $region76
        $region75: #{tpu_custom_call.1} parent=23 // pred_region
          %p655 = scmp.lt.s32.totalorder %s40, 1
          %s656 = scalar_select %p655, %s40, 1
          %s657 = scalar_lea.vmem %s12, %s656
        $region76: #{tpu_custom_call.1} parent=23 // pred_fallthru
          _
      $region24: #{tpu_custom_call.1} parent=5 // pred_fallthru
        _
      %p658 = scmp.le.s32.totalorder 1, %s31
      %p659 = scmp.lt.s32.totalorder %s31, 9
      %p660 = pnand %p658, %p659
      %p661 = pneg %p660
      // Predicated region
      $region77: #{tpu_custom_call.1} parent=5 // pred_check
        _
      $region78: #{tpu_custom_call.1} parent=5 // pred_check_branch
        %663 = sbr.rel (%p660) target = $region80
      $region79: #{tpu_custom_call.1} parent=5 // pred_region
        %s664 = ssub.s32 %s31, 1
        %p665 = scmp.lt.s32.totalorder %s41, 1
        %s666 = scalar_select %p665, %s41, 1
        %s667 = smul.addr %s666, 8
        %s668 = scalar_lea.vmem %s0, %s667
        %p669 = pneg %p76
        %p670 = pneg %p73
        %p671 = scmp.lt.s32.totalorder %s43, 1
        %s672 = scalar_select %p671, %s43, 1
        %s673 = scalar_lea.vmem %s1, %s672
        %p674 = pneg %p102
        %p675 = pneg %p99
        %p676 = scmp.lt.s32.totalorder %s43, 1
        %s677 = scalar_select %p676, %s43, 1
        %s678 = scalar_lea.vmem %s2, %s677
        %p679 = pneg %p128
        %p680 = pneg %p125
        %p681 = scmp.lt.s32.totalorder %s43, 1
        %s682 = scalar_select %p681, %s43, 1
        %s683 = smul.addr %s682, 4
        %s684 = smul.addr %s683, 4
        %s685 = scalar_lea.vmem %s3, %s684
        %p686 = pneg %p154
        %p687 = pneg %p151
        %p688 = scmp.lt.s32.totalorder %s43, 1
        %s689 = scalar_select %p688, %s43, 1
        %s690 = scalar_lea.vmem %s4, %s689
        %p691 = pneg %p180
        %p692 = pneg %p177
        %p693 = scmp.lt.s32.totalorder %s43, 1
        %s694 = scalar_select %p693, %s43, 1
        %s695 = smul.addr %s694, 4
        %s696 = smul.addr %s695, 4
        %s697 = scalar_lea.vmem %s5, %s696
        %p698 = pneg %p206
        %p699 = pneg %p203
        %p700 = scmp.lt.s32.totalorder %s43, 1
        %s701 = scalar_select %p700, %s43, 1
        %s702 = scalar_lea.vmem %s6, %s701
        %p703 = pneg %p232
        %p704 = pneg %p229
        %p705 = scmp.lt.s32.totalorder %s43, 1
        %s706 = scalar_select %p705, %s43, 1
        %s707 = scalar_lea.vmem %s7, %s706
        %p708 = pneg %p258
        %p709 = pneg %p255
        %p710 = scmp.lt.s32.totalorder %s43, 1
        %s711 = scalar_select %p710, %s43, 1
        %s712 = scalar_lea.vmem %s8, %s711
        %p713 = pneg %p284
        %p714 = pneg %p281
        %p715 = scmp.lt.s32.totalorder %s43, 1
        %s716 = scalar_select %p715, %s43, 1
        %s717 = smul.addr %s716, 4
        %s718 = smul.addr %s717, 4
        %s719 = scalar_lea.vmem %s9, %s718
        %p720 = pneg %p310
        %p721 = pneg %p307
        %p722 = scmp.lt.s32.totalorder %s43, 1
        %s723 = scalar_select %p722, %s43, 1
        %s724 = scalar_lea.vmem %s10, %s723
        %p725 = pneg %p336
        %p726 = pneg %p333
        %p727 = scmp.lt.s32.totalorder %s43, 1
        %s728 = scalar_select %p727, %s43, 1
        %s729 = smul.addr %s728, 16
        %s730 = smul.addr %s729, 4
        %s731 = scalar_lea.vmem %s11, %s730
        %p732 = pneg %p362
        %p733 = pneg %p359
        %p734 = scmp.lt.s32.totalorder %s43, 1
        %s735 = scalar_select %p734, %s43, 1
        %s736 = scalar_lea.vmem %s12, %s735
        %p737 = pneg %p388
        %p738 = pneg %p385
        %p739 = pneg %p409
        %p740 = pneg %p406
        %p741 = pneg %p430
        %p742 = pneg %p427
        %p743 = pneg %p456
        %p744 = pneg %p453
        %s745 = sand.u32 %s443, 1
        %s746 = scalar_lea.sflag [#allocation4], %s745
        %s747 = sand.u32 %s443, 1
        %s748 = smul.addr %s747, 8
        %s749 = scalar_lea.vmem [#allocation3], %s748
        %p750 = pneg %p486
        %p751 = pneg %p483
        %s752 = sand.u32 %s473, 1
        %s753 = scalar_lea.sflag [#allocation6], %s752
        %s754 = sand.u32 %s473, 1
        %s755 = smul.addr %s754, 8
        %s756 = scalar_lea.vmem [#allocation5], %s755
        %p757 = pneg %p516
        %p758 = pneg %p513
        %p759 = scmp.lt.s32.totalorder %s41, 1
        %s760 = scalar_select %p759, %s41, 1
        %p761 = scmp.lt.s32.totalorder %s42, 1
        %s762 = scalar_select %p761, %s42, 1
        %p763 = scmp.lt.s32.totalorder %s43, 1
        %s764 = scalar_select %p763, %s43, 1
        %s765 = smul.addr %s762, 2
        %s766 = sadd.s32 %s764, %s765
        %s767 = smul.addr %s760, 4
        %s768 = sadd.s32 %s766, %s767
        %s769 = scalar_lea.vmem %s17, %s768
        %p770 = pneg %p546
        %p771 = pneg %p543
        %p772 = scmp.lt.s32.totalorder %s41, 1
        %s773 = scalar_select %p772, %s41, 1
        %p774 = scmp.lt.s32.totalorder %s42, 1
        %s775 = scalar_select %p774, %s42, 1
        %p776 = scmp.lt.s32.totalorder %s43, 1
        %s777 = scalar_select %p776, %s43, 1
        %s778 = smul.addr %s775, 2
        %s779 = sadd.s32 %s777, %s778
        %s780 = smul.addr %s773, 4
        %s781 = sadd.s32 %s779, %s780
        %s782 = scalar_lea.vmem %s18, %s781
        %p783 = scmp.lt.s32.totalorder %s41, 1
        %s784 = scalar_select %p783, %s41, 1
        %s785 = smul.addr %s784, 8
        %s786 = scalar_lea.vmem %s0, %s785
        %p787 = scmp.lt.s32.totalorder %s43, 1
        %s788 = scalar_select %p787, %s43, 1
        %s789 = scalar_lea.vmem %s1, %s788
        %p790 = scmp.lt.s32.totalorder %s43, 1
        %s791 = scalar_select %p790, %s43, 1
        %s792 = scalar_lea.vmem %s2, %s791
        %p793 = scmp.lt.s32.totalorder %s43, 1
        %s794 = scalar_select %p793, %s43, 1
        %s795 = smul.addr %s794, 4
        %s796 = smul.addr %s795, 4
        %s797 = scalar_lea.vmem %s3, %s796
        %p798 = scmp.lt.s32.totalorder %s43, 1
        %s799 = scalar_select %p798, %s43, 1
        %s800 = scalar_lea.vmem %s4, %s799
        %p801 = scmp.lt.s32.totalorder %s43, 1
        %s802 = scalar_select %p801, %s43, 1
        %s803 = smul.addr %s802, 4
        %s804 = smul.addr %s803, 4
        %s805 = scalar_lea.vmem %s5, %s804
        %p806 = scmp.lt.s32.totalorder %s43, 1
        %s807 = scalar_select %p806, %s43, 1
        %s808 = scalar_lea.vmem %s6, %s807
        %p809 = scmp.lt.s32.totalorder %s43, 1
        %s810 = scalar_select %p809, %s43, 1
        %s811 = scalar_lea.vmem %s7, %s810
        %p812 = scmp.lt.s32.totalorder %s43, 1
        %s813 = scalar_select %p812, %s43, 1
        %s814 = scalar_lea.vmem %s8, %s813
        %p815 = scmp.lt.s32.totalorder %s43, 1
        %s816 = scalar_select %p815, %s43, 1
        %s817 = smul.addr %s816, 4
        %s818 = smul.addr %s817, 4
        %s819 = scalar_lea.vmem %s9, %s818
        %p820 = scmp.lt.s32.totalorder %s43, 1
        %s821 = scalar_select %p820, %s43, 1
        %s822 = scalar_lea.vmem %s10, %s821
        %p823 = scmp.lt.s32.totalorder %s43, 1
        %s824 = scalar_select %p823, %s43, 1
        %s825 = smul.addr %s824, 16
        %s826 = smul.addr %s825, 4
        %s827 = scalar_lea.vmem %s11, %s826
        %p828 = scmp.lt.s32.totalorder %s43, 1
        %s829 = scalar_select %p828, %s43, 1
        %s830 = scalar_lea.vmem %s12, %s829
        %p831 = scmp.lt.s32.totalorder %s41, 1
        %s832 = scalar_select %p831, %s41, 1
        %p833 = scmp.lt.s32.totalorder %s42, 1
        %s834 = scalar_select %p833, %s42, 1
        %p835 = scmp.lt.s32.totalorder %s43, 1
        %s836 = scalar_select %p835, %s43, 1
        %s837 = smul.addr %s834, 2
        %s838 = sadd.s32 %s836, %s837
        %s839 = smul.addr %s832, 4
        %s840 = sadd.s32 %s838, %s839
        %s841 = scalar_lea.vmem %s17, %s840
        %p842 = scmp.lt.s32.totalorder %s41, 1
        %s843 = scalar_select %p842, %s41, 1
        %p844 = scmp.lt.s32.totalorder %s42, 1
        %s845 = scalar_select %p844, %s42, 1
        %p846 = scmp.lt.s32.totalorder %s43, 1
        %s847 = scalar_select %p846, %s43, 1
        %s848 = smul.addr %s845, 2
        %s849 = sadd.s32 %s847, %s848
        %s850 = smul.addr %s843, 4
        %s851 = sadd.s32 %s849, %s850
        %s852 = scalar_lea.vmem %s18, %s851
        %p854 = scmp.eq.s32.totalorder %s42, 0
        %p855 = scmp.eq.s32.totalorder %s43, 0
        %p856 = pnand %p854, %p855
        %p857 = pneg %p856
        // Predicated region
        $region81: #{tpu_custom_call.1} parent=79 // pred_check
          _
        $region82: #{tpu_custom_call.1} parent=79 // pred_check_branch
          %859 = sbr.rel (%p856) target = $region84
        $region83: #{tpu_custom_call.1} parent=79 // pred_region
          %v860 = vld [vmem:[%s786] sm:$0xff]
          %vm861 = vcmask 261120
          %862 = vst.msk [vmem:[%s749] sm:$0xff] %vm861, %v860
        $region84: #{tpu_custom_call.1} parent=79 // pred_fallthru
          _
        %v863 = vld [vmem:[%s749] sm:$0xff]
        %v864 = vld [vmem:[%s789] sm:$0x1]
        %v865 = vld [vmem:[%s792] sm:$0x1]
        %vm866 = vcmask 261120
        %v867 = vsel %vm866, %v863, 0.0
        %868 = vadd.xlane.f32.xlu0 %v867
        %v869 = vpop.xlane.xlu0 %868
        %v870 = vrcp.pop 32.0
        %v871 = vmul.f32 %v869, %v870
        %v872 = vsub.f32 %v863, %v871
        %v873 = vmul.f32 %v872, %v872
        %v874 = vsel %vm866, %v873, 0.0
        %875 = vadd.xlane.f32.xlu0 %v874
        %v876 = vpop.xlane.xlu0 %875
        %v877 = vmul.f32 %v876, %v870
        %v878 = vadd.f32 %v877, 1e-05
        %v879 = vrsqrt.pop %v878
        %v880 = vmul.f32 %v872, %v879
        %v882 = vlaneseq
        %v883 = vshrl.u32 %v882, 7
        %v884 = vsub.s32 0, %v883
        %v885 = vrot.slane %v864, %v884
        %v887 = vmul.f32 %v880, %v885
        %v889 = vlaneseq
        %v890 = vshrl.u32 %v889, 7
        %v891 = vsub.s32 0, %v890
        %v892 = vrot.slane %v865, %v891
        %v894 = vadd.f32 %v887, %v892
        %v895 = vpack.c.bf16 %v894, %v894
        %v896 = vld [vmem:[%s797] sm:$0xf]
        %v897 = vld [vmem:[%s797 + $0x4] sm:$0xf]
        %v898 = vld [vmem:[%s797 + $0x8] sm:$0xf]
        %v899 = vld [vmem:[%s797 + $0xc] sm:$0xf]
        %v900 = vld [vmem:[%s800] sm:$0x1]
        %v902 = vlaneseq
        %v903 = vshrl.u32 %v902, 7
        %v904 = vsub.s32 0, %v903
        %v905 = vrot.slane %v900, %v904
        %v911 = vunpack.c.l.b16 %v896
        %v912 = vunpack.c.l.b16 %v897
        %v913 = vunpack.c.l.b16 %v898
        %v914 = vunpack.c.l.b16 %v899
        %v915 = vpack.c.b16 %v912, %v911
        %v916 = vpack.c.b16 %v914, %v913
        %v920 = vsel %vm866, %v895, 0
        %922 = vmatprep.subr.bf16.mxu0 0
        %923 = vmatpush1.bf16.msra.mxu0 0
        %924 = vmatprep.subr.bf16.mxu0 0
        %925 = vmatpush1.bf16.msra.mxu0 0
        %926 = vmatprep.subr.bf16.mxu0 0
        %927 = vmatpush1.bf16.msra.mxu0 0
        %928 = vmatprep.subr.bf16.mxu0 0
        %929 = vmatpush1.bf16.msra.mxu0 0
        %930 = vmatprep.subr.bf16.mxu0 0
        %931 = vmatpush1.bf16.msra.mxu0 0
        %932 = vmatprep.subr.bf16.mxu0 0
        %933 = vmatpush1.bf16.msra.mxu0 0
        %934 = vmatprep.subr.bf16.mxu0 0
        %935 = vmatpush1.bf16.msra.mxu0 %v916
        %936 = vmatprep.subr.bf16.mxu0 0
        %937 = vmatpush1.bf16.msra.mxu0 %v915
        %938 = vmatprep.subr.bf16.mxu0 0
        %939 = vmatpush2.bf16.msra.mxu0 0
        %940 = vmatprep.subr.bf16.mxu0 0
        %941 = vmatpush2.bf16.msra.mxu0 0
        %942 = vmatprep.subr.bf16.mxu0 0
        %943 = vmatpush2.bf16.msra.mxu0 0
        %944 = vmatprep.subr.bf16.mxu0 0
        %945 = vmatpush2.bf16.msra.mxu0 0
        %946 = vmatprep.subr.bf16.mxu0 0
        %947 = vmatpush2.bf16.msra.mxu0 0
        %948 = vmatprep.subr.bf16.mxu0 0
        %949 = vmatpush2.bf16.msra.mxu0 0
        %950 = vmatprep.subr.bf16.mxu0 0
        %951 = vmatpush2.bf16.msra.mxu0 0
        %952 = vmatprep.subr.bf16.mxu0 0
        %953 = vmatpush2.bf16.msra.mxu0 0
        %954 = vmatprep.mubr.bf16.mxu0 0
        %955 = vmatmul.mubr.bf16.gmra.mxu0 %v920
        %v956 = vpop.f32.mrf.mxu0
        %v957 = vadd.f32 %v905, %v956
        %v958 = vpop.f32.mrf.mxu0
        %v959 = vpop.f32.mrf.mxu0
        %v960 = vpop.f32.mrf.mxu0
        %961 = vdwg.mxu0
        %v962 = vlaneseq
        %v963 = vshrl.u32 %v962, 7
        %v964 = vlaneseq
        %v965 = vand.u32 %v964, 127
        %vm966 = vcmp.le.s32.totalorder %v965, %v963
        %v967 = vpack.c.bf16 %v957, %v957
        %969 = vrot.lane.b32.xlu0 %v967, 96
        %v970 = vpop.permute.xlu0 %969
        %vm971 = vcmask 64512
        %v973 = vsel %vm971, %v967, 0
        %v976 = vsel %vm971, %v970, 0
        %978 = vmatprep.subr.bf16.mxu0 0
        %979 = vmatpush1.bf16.xpose.msra.mxu0 0
        %980 = vmatprep.subr.bf16.mxu0 0
        %981 = vmatpush1.bf16.xpose.msra.mxu0 0
        %982 = vmatprep.subr.bf16.mxu0 0
        %983 = vmatpush1.bf16.xpose.msra.mxu0 0
        %984 = vmatprep.subr.bf16.mxu0 0
        %985 = vmatpush1.bf16.xpose.msra.mxu0 0
        %986 = vmatprep.subr.bf16.mxu0 0
        %987 = vmatpush1.bf16.xpose.msra.mxu0 0
        %988 = vmatprep.subr.bf16.mxu0 0
        %989 = vmatpush1.bf16.xpose.msra.mxu0 0
        %990 = vmatprep.subr.bf16.mxu0 0
        %991 = vmatpush1.bf16.xpose.msra.mxu0 0
        %992 = vmatprep.subr.bf16.mxu0 0
        %993 = vmatpush1.bf16.xpose.msra.mxu0 %v976
        %994 = vmatprep.subr.bf16.mxu0 0
        %995 = vmatpush2.bf16.xpose.msra.mxu0 0
        %996 = vmatprep.subr.bf16.mxu0 0
        %997 = vmatpush2.bf16.xpose.msra.mxu0 0
        %998 = vmatprep.subr.bf16.mxu0 0
        %999 = vmatpush2.bf16.xpose.msra.mxu0 0
        %1000 = vmatprep.subr.bf16.mxu0 0
        %1001 = vmatpush2.bf16.xpose.msra.mxu0 0
        %1002 = vmatprep.subr.bf16.mxu0 0
        %1003 = vmatpush2.bf16.xpose.msra.mxu0 0
        %1004 = vmatprep.subr.bf16.mxu0 0
        %1005 = vmatpush2.bf16.xpose.msra.mxu0 0
        %1006 = vmatprep.subr.bf16.mxu0 0
        %1007 = vmatpush2.bf16.xpose.msra.mxu0 0
        %1008 = vmatprep.subr.bf16.mxu0 0
        %1009 = vmatpush2.bf16.xpose.msra.mxu0 0
        %1010 = vmatprep.mubr.bf16.mxu0 0
        %1011 = vmatmul.mubr.bf16.gmra.mxu0 %v973
        %v1012 = vpop.f32.mrf.mxu0
        %v1013 = vadd.f32 0.0, %v1012
        %v1014 = vpop.f32.mrf.mxu0
        %v1015 = vpop.f32.mrf.mxu0
        %v1016 = vpop.f32.mrf.mxu0
        %1017 = vdwg.mxu0
        %v1018 = vmul.f32 %v1013, 0.35355338
        %v1019 = vsel %vm966, %v1018, -1e+30
        %v1020 = vsel %vm971, %v1019, -inf
        %1021 = vmax.xlane.f32.xlu0 %v1020
        %v1022 = vpop.xlane.xlu0 %1021
        %v1023 = vsub.f32 %v1019, %v1022
        %v1024 = vmul.f32 %v1023, 1.442695
        %v1025 = vpow.pop %v1024
        %v1026 = vsel %vm971, %v1025, 0.0
        %1027 = vadd.xlane.f32.xlu0 %v1026
        %v1028 = vpop.xlane.xlu0 %1027
        %v1029 = vrcp.pop %v1028
        %v1030 = vmul.f32 %v1025, %v1029
        %v1031 = vpack.c.bf16 %v1030, %v1030
        %1032 = vrot.lane.b32.xlu0 %v967, 64
        %v1033 = vpop.permute.xlu0 %1032
        %v1035 = vsel %vm971, %v1031, 0
        %vm1037 = vcmask 1043456
        %v1039 = vsel %vm1037, %v1033, 0
        %1041 = vmatprep.subr.bf16.mxu0 0
        %1042 = vmatpush1.bf16.msra.mxu0 0
        %1043 = vmatprep.subr.bf16.mxu0 0
        %1044 = vmatpush1.bf16.msra.mxu0 0
        %1045 = vmatprep.subr.bf16.mxu0 0
        %1046 = vmatpush1.bf16.msra.mxu0 0
        %1047 = vmatprep.subr.bf16.mxu0 0
        %1048 = vmatpush1.bf16.msra.mxu0 0
        %1049 = vmatprep.subr.bf16.mxu0 0
        %1050 = vmatpush1.bf16.msra.mxu0 0
        %1051 = vmatprep.subr.bf16.mxu0 0
        %1052 = vmatpush1.bf16.msra.mxu0 0
        %1053 = vmatprep.subr.bf16.mxu0 0
        %1054 = vmatpush1.bf16.msra.mxu0 0
        %1055 = vmatprep.subr.bf16.mxu0 0
        %1056 = vmatpush1.bf16.msra.mxu0 %v1039
        %1057 = vmatprep.subr.bf16.mxu0 0
        %1058 = vmatpush2.bf16.msra.mxu0 0
        %1059 = vmatprep.subr.bf16.mxu0 0
        %1060 = vmatpush2.bf16.msra.mxu0 0
        %1061 = vmatprep.subr.bf16.mxu0 0
        %1062 = vmatpush2.bf16.msra.mxu0 0
        %1063 = vmatprep.subr.bf16.mxu0 0
        %1064 = vmatpush2.bf16.msra.mxu0 0
        %1065 = vmatprep.subr.bf16.mxu0 0
        %1066 = vmatpush2.bf16.msra.mxu0 0
        %1067 = vmatprep.subr.bf16.mxu0 0
        %1068 = vmatpush2.bf16.msra.mxu0 0
        %1069 = vmatprep.subr.bf16.mxu0 0
        %1070 = vmatpush2.bf16.msra.mxu0 0
        %1071 = vmatprep.subr.bf16.mxu0 0
        %1072 = vmatpush2.bf16.msra.mxu0 0
        %1073 = vmatprep.mubr.bf16.mxu0 0
        %1074 = vmatmul.mubr.bf16.gmra.mxu0 %v1035
        %v1075 = vpop.f32.mrf.mxu0
        %v1076 = vadd.f32 0.0, %v1075
        %v1077 = vpop.f32.mrf.mxu0
        %v1078 = vpop.f32.mrf.mxu0
        %v1079 = vpop.f32.mrf.mxu0
        %1080 = vdwg.mxu0
        %1081 = vst.msk [vmem:[#allocation2] sm:$0xff] %vm971, %v1076
        %1082 = vrot.lane.b32.xlu0 %v967, 120
        %v1083 = vpop.permute.xlu0 %1082
        %1084 = vrot.lane.b32.xlu0 %v967, 88
        %v1085 = vpop.permute.xlu0 %1084
        %v1087 = vsel %vm971, %v1083, 0
        %v1090 = vsel %vm971, %v1085, 0
        %1092 = vmatprep.subr.bf16.mxu0 0
        %1093 = vmatpush1.bf16.xpose.msra.mxu0 0
        %1094 = vmatprep.subr.bf16.mxu0 0
        %1095 = vmatpush1.bf16.xpose.msra.mxu0 0
        %1096 = vmatprep.subr.bf16.mxu0 0
        %1097 = vmatpush1.bf16.xpose.msra.mxu0 0
        %1098 = vmatprep.subr.bf16.mxu0 0
        %1099 = vmatpush1.bf16.xpose.msra.mxu0 0
        %1100 = vmatprep.subr.bf16.mxu0 0
        %1101 = vmatpush1.bf16.xpose.msra.mxu0 0
        %1102 = vmatprep.subr.bf16.mxu0 0
        %1103 = vmatpush1.bf16.xpose.msra.mxu0 0
        %1104 = vmatprep.subr.bf16.mxu0 0
        %1105 = vmatpush1.bf16.xpose.msra.mxu0 0
        %1106 = vmatprep.subr.bf16.mxu0 0
        %1107 = vmatpush1.bf16.xpose.msra.mxu0 %v1090
        %1108 = vmatprep.subr.bf16.mxu0 0
        %1109 = vmatpush2.bf16.xpose.msra.mxu0 0
        %1110 = vmatprep.subr.bf16.mxu0 0
        %1111 = vmatpush2.bf16.xpose.msra.mxu0 0
        %1112 = vmatprep.subr.bf16.mxu0 0
        %1113 = vmatpush2.bf16.xpose.msra.mxu0 0
        %1114 = vmatprep.subr.bf16.mxu0 0
        %1115 = vmatpush2.bf16.xpose.msra.mxu0 0
        %1116 = vmatprep.subr.bf16.mxu0 0
        %1117 = vmatpush2.bf16.xpose.msra.mxu0 0
        %1118 = vmatprep.subr.bf16.mxu0 0
        %1119 = vmatpush2.bf16.xpose.msra.mxu0 0
        %1120 = vmatprep.subr.bf16.mxu0 0
        %1121 = vmatpush2.bf16.xpose.msra.mxu0 0
        %1122 = vmatprep.subr.bf16.mxu0 0
        %1123 = vmatpush2.bf16.xpose.msra.mxu0 0
        %1124 = vmatprep.mubr.bf16.mxu0 0
        %1125 = vmatmul.mubr.bf16.gmra.mxu0 %v1087
        %v1126 = vpop.f32.mrf.mxu0
        %v1127 = vadd.f32 0.0, %v1126
        %v1128 = vpop.f32.mrf.mxu0
        %v1129 = vpop.f32.mrf.mxu0
        %v1130 = vpop.f32.mrf.mxu0
        %1131 = vdwg.mxu0
        %v1132 = vmul.f32 %v1127, 0.35355338
        %v1133 = vsel %vm966, %v1132, -1e+30
        %v1134 = vsel %vm971, %v1133, -inf
        %1135 = vmax.xlane.f32.xlu0 %v1134
        %v1136 = vpop.xlane.xlu0 %1135
        %v1137 = vsub.f32 %v1133, %v1136
        %v1138 = vmul.f32 %v1137, 1.442695
        %v1139 = vpow.pop %v1138
        %v1140 = vsel %vm971, %v1139, 0.0
        %1141 = vadd.xlane.f32.xlu0 %v1140
        %v1142 = vpop.xlane.xlu0 %1141
        %v1143 = vrcp.pop %v1142
        %v1144 = vmul.f32 %v1139, %v1143
        %v1145 = vpack.c.bf16 %v1144, %v1144
        %1146 = vrot.lane.b32.xlu0 %v967, 56
        %v1147 = vpop.permute.xlu0 %1146
        %v1149 = vsel %vm971, %v1145, 0
        %v1152 = vsel %vm1037, %v1147, 0
        %1154 = vmatprep.subr.bf16.mxu0 0
        %1155 = vmatpush1.bf16.msra.mxu0 0
        %1156 = vmatprep.subr.bf16.mxu0 0
        %1157 = vmatpush1.bf16.msra.mxu0 0
        %1158 = vmatprep.subr.bf16.mxu0 0
        %1159 = vmatpush1.bf16.msra.mxu0 0
        %1160 = vmatprep.subr.bf16.mxu0 0
        %1161 = vmatpush1.bf16.msra.mxu0 0
        %1162 = vmatprep.subr.bf16.mxu0 0
        %1163 = vmatpush1.bf16.msra.mxu0 0
        %1164 = vmatprep.subr.bf16.mxu0 0
        %1165 = vmatpush1.bf16.msra.mxu0 0
        %1166 = vmatprep.subr.bf16.mxu0 0
        %1167 = vmatpush1.bf16.msra.mxu0 0
        %1168 = vmatprep.subr.bf16.mxu0 0
        %1169 = vmatpush1.bf16.msra.mxu0 %v1152
        %1170 = vmatprep.subr.bf16.mxu0 0
        %1171 = vmatpush2.bf16.msra.mxu0 0
        %1172 = vmatprep.subr.bf16.mxu0 0
        %1173 = vmatpush2.bf16.msra.mxu0 0
        %1174 = vmatprep.subr.bf16.mxu0 0
        %1175 = vmatpush2.bf16.msra.mxu0 0
        %1176 = vmatprep.subr.bf16.mxu0 0
        %1177 = vmatpush2.bf16.msra.mxu0 0
        %1178 = vmatprep.subr.bf16.mxu0 0
        %1179 = vmatpush2.bf16.msra.mxu0 0
        %1180 = vmatprep.subr.bf16.mxu0 0
        %1181 = vmatpush2.bf16.msra.mxu0 0
        %1182 = vmatprep.subr.bf16.mxu0 0
        %1183 = vmatpush2.bf16.msra.mxu0 0
        %1184 = vmatprep.subr.bf16.mxu0 0
        %1185 = vmatpush2.bf16.msra.mxu0 0
        %1186 = vmatprep.mubr.bf16.mxu0 0
        %1187 = vmatmul.mubr.bf16.gmra.mxu0 %v1149
        %v1188 = vpop.f32.mrf.mxu0
        %v1189 = vadd.f32 0.0, %v1188
        %v1190 = vpop.f32.mrf.mxu0
        %v1191 = vpop.f32.mrf.mxu0
        %v1192 = vpop.f32.mrf.mxu0
        %1193 = vdwg.mxu0
        %1195 = vrot.lane.b32.xlu0 %v1189, 8
        %v1196 = vpop.permute.xlu0 %1195
        %vm1198 = vcmask 130112
        %1199 = vst.msk [vmem:[#allocation2] sm:$0xff] %vm1198, %v1196
        %1200 = vrot.lane.b32.xlu0 %v967, 112
        %v1201 = vpop.permute.xlu0 %1200
        %1202 = vrot.lane.b32.xlu0 %v967, 80
        %v1203 = vpop.permute.xlu0 %1202
        %v1205 = vsel %vm971, %v1201, 0
        %v1208 = vsel %vm971, %v1203, 0
        %1210 = vmatprep.subr.bf16.mxu0 0
        %1211 = vmatpush1.bf16.xpose.msra.mxu0 0
        %1212 = vmatprep.subr.bf16.mxu0 0
        %1213 = vmatpush1.bf16.xpose.msra.mxu0 0
        %1214 = vmatprep.subr.bf16.mxu0 0
        %1215 = vmatpush1.bf16.xpose.msra.mxu0 0
        %1216 = vmatprep.subr.bf16.mxu0 0
        %1217 = vmatpush1.bf16.xpose.msra.mxu0 0
        %1218 = vmatprep.subr.bf16.mxu0 0
        %1219 = vmatpush1.bf16.xpose.msra.mxu0 0
        %1220 = vmatprep.subr.bf16.mxu0 0
        %1221 = vmatpush1.bf16.xpose.msra.mxu0 0
        %1222 = vmatprep.subr.bf16.mxu0 0
        %1223 = vmatpush1.bf16.xpose.msra.mxu0 0
        %1224 = vmatprep.subr.bf16.mxu0 0
        %1225 = vmatpush1.bf16.xpose.msra.mxu0 %v1208
        %1226 = vmatprep.subr.bf16.mxu0 0
        %1227 = vmatpush2.bf16.xpose.msra.mxu0 0
        %1228 = vmatprep.subr.bf16.mxu0 0
        %1229 = vmatpush2.bf16.xpose.msra.mxu0 0
        %1230 = vmatprep.subr.bf16.mxu0 0
        %1231 = vmatpush2.bf16.xpose.msra.mxu0 0
        %1232 = vmatprep.subr.bf16.mxu0 0
        %1233 = vmatpush2.bf16.xpose.msra.mxu0 0
        %1234 = vmatprep.subr.bf16.mxu0 0
        %1235 = vmatpush2.bf16.xpose.msra.mxu0 0
        %1236 = vmatprep.subr.bf16.mxu0 0
        %1237 = vmatpush2.bf16.xpose.msra.mxu0 0
        %1238 = vmatprep.subr.bf16.mxu0 0
        %1239 = vmatpush2.bf16.xpose.msra.mxu0 0
        %1240 = vmatprep.subr.bf16.mxu0 0
        %1241 = vmatpush2.bf16.xpose.msra.mxu0 0
        %1242 = vmatprep.mubr.bf16.mxu0 0
        %1243 = vmatmul.mubr.bf16.gmra.mxu0 %v1205
        %v1244 = vpop.f32.mrf.mxu0
        %v1245 = vadd.f32 0.0, %v1244
        %v1246 = vpop.f32.mrf.mxu0
        %v1247 = vpop.f32.mrf.mxu0
        %v1248 = vpop.f32.mrf.mxu0
        %1249 = vdwg.mxu0
        %v1250 = vmul.f32 %v1245, 0.35355338
        %v1251 = vsel %vm966, %v1250, -1e+30
        %v1252 = vsel %vm971, %v1251, -inf
        %1253 = vmax.xlane.f32.xlu0 %v1252
        %v1254 = vpop.xlane.xlu0 %1253
        %v1255 = vsub.f32 %v1251, %v1254
        %v1256 = vmul.f32 %v1255, 1.442695
        %v1257 = vpow.pop %v1256
        %v1258 = vsel %vm971, %v1257, 0.0
        %1259 = vadd.xlane.f32.xlu0 %v1258
        %v1260 = vpop.xlane.xlu0 %1259
        %v1261 = vrcp.pop %v1260
        %v1262 = vmul.f32 %v1257, %v1261
        %v1263 = vpack.c.bf16 %v1262, %v1262
        %1264 = vrot.lane.b32.xlu0 %v967, 48
        %v1265 = vpop.permute.xlu0 %1264
        %v1267 = vsel %vm971, %v1263, 0
        %v1270 = vsel %vm1037, %v1265, 0
        %1272 = vmatprep.subr.bf16.mxu0 0
        %1273 = vmatpush1.bf16.msra.mxu0 0
        %1274 = vmatprep.subr.bf16.mxu0 0
        %1275 = vmatpush1.bf16.msra.mxu0 0
        %1276 = vmatprep.subr.bf16.mxu0 0
        %1277 = vmatpush1.bf16.msra.mxu0 0
        %1278 = vmatprep.subr.bf16.mxu0 0
        %1279 = vmatpush1.bf16.msra.mxu0 0
        %1280 = vmatprep.subr.bf16.mxu0 0
        %1281 = vmatpush1.bf16.msra.mxu0 0
        %1282 = vmatprep.subr.bf16.mxu0 0
        %1283 = vmatpush1.bf16.msra.mxu0 0
        %1284 = vmatprep.subr.bf16.mxu0 0
        %1285 = vmatpush1.bf16.msra.mxu0 0
        %1286 = vmatprep.subr.bf16.mxu0 0
        %1287 = vmatpush1.bf16.msra.mxu0 %v1270
        %1288 = vmatprep.subr.bf16.mxu0 0
        %1289 = vmatpush2.bf16.msra.mxu0 0
        %1290 = vmatprep.subr.bf16.mxu0 0
        %1291 = vmatpush2.bf16.msra.mxu0 0
        %1292 = vmatprep.subr.bf16.mxu0 0
        %1293 = vmatpush2.bf16.msra.mxu0 0
        %1294 = vmatprep.subr.bf16.mxu0 0
        %1295 = vmatpush2.bf16.msra.mxu0 0
        %1296 = vmatprep.subr.bf16.mxu0 0
        %1297 = vmatpush2.bf16.msra.mxu0 0
        %1298 = vmatprep.subr.bf16.mxu0 0
        %1299 = vmatpush2.bf16.msra.mxu0 0
        %1300 = vmatprep.subr.bf16.mxu0 0
        %1301 = vmatpush2.bf16.msra.mxu0 0
        %1302 = vmatprep.subr.bf16.mxu0 0
        %1303 = vmatpush2.bf16.msra.mxu0 0
        %1304 = vmatprep.mubr.bf16.mxu0 0
        %1305 = vmatmul.mubr.bf16.gmra.mxu0 %v1267
        %v1306 = vpop.f32.mrf.mxu0
        %v1307 = vadd.f32 0.0, %v1306
        %v1308 = vpop.f32.mrf.mxu0
        %v1309 = vpop.f32.mrf.mxu0
        %v1310 = vpop.f32.mrf.mxu0
        %1311 = vdwg.mxu0
        %1313 = vrot.lane.b32.xlu0 %v1307, 16
        %v1314 = vpop.permute.xlu0 %1313
        %vm1316 = vcmask 195712
        %1317 = vst.msk [vmem:[#allocation2] sm:$0xff] %vm1316, %v1314
        %1318 = vrot.lane.b32.xlu0 %v967, 104
        %v1319 = vpop.permute.xlu0 %1318
        %1320 = vrot.lane.b32.xlu0 %v967, 72
        %v1321 = vpop.permute.xlu0 %1320
        %v1323 = vsel %vm971, %v1319, 0
        %v1326 = vsel %vm971, %v1321, 0
        %1328 = vmatprep.subr.bf16.mxu0 0
        %1329 = vmatpush1.bf16.xpose.msra.mxu0 0
        %1330 = vmatprep.subr.bf16.mxu0 0
        %1331 = vmatpush1.bf16.xpose.msra.mxu0 0
        %1332 = vmatprep.subr.bf16.mxu0 0
        %1333 = vmatpush1.bf16.xpose.msra.mxu0 0
        %1334 = vmatprep.subr.bf16.mxu0 0
        %1335 = vmatpush1.bf16.xpose.msra.mxu0 0
        %1336 = vmatprep.subr.bf16.mxu0 0
        %1337 = vmatpush1.bf16.xpose.msra.mxu0 0
        %1338 = vmatprep.subr.bf16.mxu0 0
        %1339 = vmatpush1.bf16.xpose.msra.mxu0 0
        %1340 = vmatprep.subr.bf16.mxu0 0
        %1341 = vmatpush1.bf16.xpose.msra.mxu0 0
        %1342 = vmatprep.subr.bf16.mxu0 0
        %1343 = vmatpush1.bf16.xpose.msra.mxu0 %v1326
        %1344 = vmatprep.subr.bf16.mxu0 0
        %1345 = vmatpush2.bf16.xpose.msra.mxu0 0
        %1346 = vmatprep.subr.bf16.mxu0 0
        %1347 = vmatpush2.bf16.xpose.msra.mxu0 0
        %1348 = vmatprep.subr.bf16.mxu0 0
        %1349 = vmatpush2.bf16.xpose.msra.mxu0 0
        %1350 = vmatprep.subr.bf16.mxu0 0
        %1351 = vmatpush2.bf16.xpose.msra.mxu0 0
        %1352 = vmatprep.subr.bf16.mxu0 0
        %1353 = vmatpush2.bf16.xpose.msra.mxu0 0
        %1354 = vmatprep.subr.bf16.mxu0 0
        %1355 = vmatpush2.bf16.xpose.msra.mxu0 0
        %1356 = vmatprep.subr.bf16.mxu0 0
        %1357 = vmatpush2.bf16.xpose.msra.mxu0 0
        %1358 = vmatprep.subr.bf16.mxu0 0
        %1359 = vmatpush2.bf16.xpose.msra.mxu0 0
        %1360 = vmatprep.mubr.bf16.mxu0 0
        %1361 = vmatmul.mubr.bf16.gmra.mxu0 %v1323
        %v1362 = vpop.f32.mrf.mxu0
        %v1363 = vadd.f32 0.0, %v1362
        %v1364 = vpop.f32.mrf.mxu0
        %v1365 = vpop.f32.mrf.mxu0
        %v1366 = vpop.f32.mrf.mxu0
        %1367 = vdwg.mxu0
        %v1368 = vmul.f32 %v1363, 0.35355338
        %v1369 = vsel %vm966, %v1368, -1e+30
        %v1370 = vsel %vm971, %v1369, -inf
        %1371 = vmax.xlane.f32.xlu0 %v1370
        %v1372 = vpop.xlane.xlu0 %1371
        %v1373 = vsub.f32 %v1369, %v1372
        %v1374 = vmul.f32 %v1373, 1.442695
        %v1375 = vpow.pop %v1374
        %v1376 = vsel %vm971, %v1375, 0.0
        %1377 = vadd.xlane.f32.xlu0 %v1376
        %v1378 = vpop.xlane.xlu0 %1377
        %v1379 = vrcp.pop %v1378
        %v1380 = vmul.f32 %v1375, %v1379
        %v1381 = vpack.c.bf16 %v1380, %v1380
        %1382 = vrot.lane.b32.xlu0 %v967, 40
        %v1383 = vpop.permute.xlu0 %1382
        %v1385 = vsel %vm971, %v1381, 0
        %v1388 = vsel %vm1037, %v1383, 0
        %1390 = vmatprep.subr.bf16.mxu0 0
        %1391 = vmatpush1.bf16.msra.mxu0 0
        %1392 = vmatprep.subr.bf16.mxu0 0
        %1393 = vmatpush1.bf16.msra.mxu0 0
        %1394 = vmatprep.subr.bf16.mxu0 0
        %1395 = vmatpush1.bf16.msra.mxu0 0
        %1396 = vmatprep.subr.bf16.mxu0 0
        %1397 = vmatpush1.bf16.msra.mxu0 0
        %1398 = vmatprep.subr.bf16.mxu0 0
        %1399 = vmatpush1.bf16.msra.mxu0 0
        %1400 = vmatprep.subr.bf16.mxu0 0
        %1401 = vmatpush1.bf16.msra.mxu0 0
        %1402 = vmatprep.subr.bf16.mxu0 0
        %1403 = vmatpush1.bf16.msra.mxu0 0
        %1404 = vmatprep.subr.bf16.mxu0 0
        %1405 = vmatpush1.bf16.msra.mxu0 %v1388
        %1406 = vmatprep.subr.bf16.mxu0 0
        %1407 = vmatpush2.bf16.msra.mxu0 0
        %1408 = vmatprep.subr.bf16.mxu0 0
        %1409 = vmatpush2.bf16.msra.mxu0 0
        %1410 = vmatprep.subr.bf16.mxu0 0
        %1411 = vmatpush2.bf16.msra.mxu0 0
        %1412 = vmatprep.subr.bf16.mxu0 0
        %1413 = vmatpush2.bf16.msra.mxu0 0
        %1414 = vmatprep.subr.bf16.mxu0 0
        %1415 = vmatpush2.bf16.msra.mxu0 0
        %1416 = vmatprep.subr.bf16.mxu0 0
        %1417 = vmatpush2.bf16.msra.mxu0 0
        %1418 = vmatprep.subr.bf16.mxu0 0
        %1419 = vmatpush2.bf16.msra.mxu0 0
        %1420 = vmatprep.subr.bf16.mxu0 0
        %1421 = vmatpush2.bf16.msra.mxu0 0
        %1422 = vmatprep.mubr.bf16.mxu0 0
        %1423 = vmatmul.mubr.bf16.gmra.mxu0 %v1385
        %v1424 = vpop.f32.mrf.mxu0
        %v1425 = vadd.f32 0.0, %v1424
        %v1426 = vpop.f32.mrf.mxu0
        %v1427 = vpop.f32.mrf.mxu0
        %v1428 = vpop.f32.mrf.mxu0
        %1429 = vdwg.mxu0
        %1431 = vrot.lane.b32.xlu0 %v1425, 24
        %v1432 = vpop.permute.xlu0 %1431
        %vm1434 = vcmask 261312
        %1435 = vst.msk [vmem:[#allocation2] sm:$0xff] %vm1434, %v1432
        %v1436 = vld [vmem:[#allocation2] sm:$0xff]
        %v1437 = vpack.c.bf16 %v1436, %v1436
        %v1438 = vld [vmem:[%s805] sm:$0xf]
        %v1439 = vld [vmem:[%s805 + $0x4] sm:$0xf]
        %v1440 = vld [vmem:[%s805 + $0x8] sm:$0xf]
        %v1441 = vld [vmem:[%s805 + $0xc] sm:$0xf]
        %v1442 = vld [vmem:[%s808] sm:$0x1]
        %v1444 = vlaneseq
        %v1445 = vshrl.u32 %v1444, 7
        %v1446 = vsub.s32 0, %v1445
        %v1447 = vrot.slane %v1442, %v1446
        %v1453 = vunpack.c.l.b16 %v1438
        %v1454 = vunpack.c.l.b16 %v1439
        %v1455 = vunpack.c.l.b16 %v1440
        %v1456 = vunpack.c.l.b16 %v1441
        %v1457 = vpack.c.b16 %v1454, %v1453
        %v1458 = vpack.c.b16 %v1456, %v1455
        %v1462 = vsel %vm866, %v1437, 0
        %1464 = vmatprep.subr.bf16.mxu0 0
        %1465 = vmatpush1.bf16.msra.mxu0 0
        %1466 = vmatprep.subr.bf16.mxu0 0
        %1467 = vmatpush1.bf16.msra.mxu0 0
        %1468 = vmatprep.subr.bf16.mxu0 0
        %1469 = vmatpush1.bf16.msra.mxu0 0
        %1470 = vmatprep.subr.bf16.mxu0 0
        %1471 = vmatpush1.bf16.msra.mxu0 0
        %1472 = vmatprep.subr.bf16.mxu0 0
        %1473 = vmatpush1.bf16.msra.mxu0 0
        %1474 = vmatprep.subr.bf16.mxu0 0
        %1475 = vmatpush1.bf16.msra.mxu0 0
        %1476 = vmatprep.subr.bf16.mxu0 0
        %1477 = vmatpush1.bf16.msra.mxu0 %v1458
        %1478 = vmatprep.subr.bf16.mxu0 0
        %1479 = vmatpush1.bf16.msra.mxu0 %v1457
        %1480 = vmatprep.subr.bf16.mxu0 0
        %1481 = vmatpush2.bf16.msra.mxu0 0
        %1482 = vmatprep.subr.bf16.mxu0 0
        %1483 = vmatpush2.bf16.msra.mxu0 0
        %1484 = vmatprep.subr.bf16.mxu0 0
        %1485 = vmatpush2.bf16.msra.mxu0 0
        %1486 = vmatprep.subr.bf16.mxu0 0
        %1487 = vmatpush2.bf16.msra.mxu0 0
        %1488 = vmatprep.subr.bf16.mxu0 0
        %1489 = vmatpush2.bf16.msra.mxu0 0
        %1490 = vmatprep.subr.bf16.mxu0 0
        %1491 = vmatpush2.bf16.msra.mxu0 0
        %1492 = vmatprep.subr.bf16.mxu0 0
        %1493 = vmatpush2.bf16.msra.mxu0 0
        %1494 = vmatprep.subr.bf16.mxu0 0
        %1495 = vmatpush2.bf16.msra.mxu0 0
        %1496 = vmatprep.mubr.bf16.mxu0 0
        %1497 = vmatmul.mubr.bf16.gmra.mxu0 %v1462
        %v1498 = vpop.f32.mrf.mxu0
        %v1499 = vadd.f32 %v1447, %v1498
        %v1500 = vpop.f32.mrf.mxu0
        %v1501 = vpop.f32.mrf.mxu0
        %v1502 = vpop.f32.mrf.mxu0
        %1503 = vdwg.mxu0
        %v1504 = vadd.f32 %v863, %v1499
        %v1505 = vld [vmem:[%s811] sm:$0x1]
        %v1506 = vld [vmem:[%s814] sm:$0x1]
        %v1507 = vsel %vm866, %v1504, 0.0
        %1508 = vadd.xlane.f32.xlu0 %v1507
        %v1509 = vpop.xlane.xlu0 %1508
        %v1510 = vmul.f32 %v1509, %v870
        %v1511 = vsub.f32 %v1504, %v1510
        %v1512 = vmul.f32 %v1511, %v1511
        %v1513 = vsel %vm866, %v1512, 0.0
        %1514 = vadd.xlane.f32.xlu0 %v1513
        %v1515 = vpop.xlane.xlu0 %1514
        %v1516 = vmul.f32 %v1515, %v870
        %v1517 = vadd.f32 %v1516, 1e-05
        %v1518 = vrsqrt.pop %v1517
        %v1519 = vmul.f32 %v1511, %v1518
        %v1521 = vlaneseq
        %v1522 = vshrl.u32 %v1521, 7
        %v1523 = vsub.s32 0, %v1522
        %v1524 = vrot.slane %v1505, %v1523
        %v1526 = vmul.f32 %v1519, %v1524
        %v1528 = vlaneseq
        %v1529 = vshrl.u32 %v1528, 7
        %v1530 = vsub.s32 0, %v1529
        %v1531 = vrot.slane %v1506, %v1530
        %v1533 = vadd.f32 %v1526, %v1531
        %v1534 = vpack.c.bf16 %v1533, %v1533
        %v1535 = vld [vmem:[%s819] sm:$0xf]
        %v1536 = vld [vmem:[%s819 + $0x4] sm:$0xf]
        %v1537 = vld [vmem:[%s819 + $0x8] sm:$0xf]
        %v1538 = vld [vmem:[%s819 + $0xc] sm:$0xf]
        %v1539 = vld [vmem:[%s822] sm:$0x1]
        %v1541 = vlaneseq
        %v1542 = vshrl.u32 %v1541, 7
        %v1543 = vsub.s32 0, %v1542
        %v1544 = vrot.slane %v1539, %v1543
        %v1550 = vunpack.c.l.b16 %v1535
        %v1551 = vunpack.c.l.b16 %v1536
        %v1552 = vunpack.c.l.b16 %v1537
        %v1553 = vunpack.c.l.b16 %v1538
        %v1554 = vpack.c.b16 %v1551, %v1550
        %v1555 = vpack.c.b16 %v1553, %v1552
        %v1559 = vsel %vm866, %v1534, 0
        %1561 = vmatprep.subr.bf16.mxu0 0
        %1562 = vmatpush1.bf16.msra.mxu0 0
        %1563 = vmatprep.subr.bf16.mxu0 0
        %1564 = vmatpush1.bf16.msra.mxu0 0
        %1565 = vmatprep.subr.bf16.mxu0 0
        %1566 = vmatpush1.bf16.msra.mxu0 0
        %1567 = vmatprep.subr.bf16.mxu0 0
        %1568 = vmatpush1.bf16.msra.mxu0 0
        %1569 = vmatprep.subr.bf16.mxu0 0
        %1570 = vmatpush1.bf16.msra.mxu0 0
        %1571 = vmatprep.subr.bf16.mxu0 0
        %1572 = vmatpush1.bf16.msra.mxu0 0
        %1573 = vmatprep.subr.bf16.mxu0 0
        %1574 = vmatpush1.bf16.msra.mxu0 %v1555
        %1575 = vmatprep.subr.bf16.mxu0 0
        %1576 = vmatpush1.bf16.msra.mxu0 %v1554
        %1577 = vmatprep.subr.bf16.mxu0 0
        %1578 = vmatpush2.bf16.msra.mxu0 0
        %1579 = vmatprep.subr.bf16.mxu0 0
        %1580 = vmatpush2.bf16.msra.mxu0 0
        %1581 = vmatprep.subr.bf16.mxu0 0
        %1582 = vmatpush2.bf16.msra.mxu0 0
        %1583 = vmatprep.subr.bf16.mxu0 0
        %1584 = vmatpush2.bf16.msra.mxu0 0
        %1585 = vmatprep.subr.bf16.mxu0 0
        %1586 = vmatpush2.bf16.msra.mxu0 0
        %1587 = vmatprep.subr.bf16.mxu0 0
        %1588 = vmatpush2.bf16.msra.mxu0 0
        %1589 = vmatprep.subr.bf16.mxu0 0
        %1590 = vmatpush2.bf16.msra.mxu0 0
        %1591 = vmatprep.subr.bf16.mxu0 0
        %1592 = vmatpush2.bf16.msra.mxu0 0
        %1593 = vmatprep.mubr.bf16.mxu0 0
        %1594 = vmatmul.mubr.bf16.gmra.mxu0 %v1559
        %v1595 = vpop.f32.mrf.mxu0
        %v1596 = vadd.f32 %v1544, %v1595
        %v1597 = vpop.f32.mrf.mxu0
        %v1598 = vpop.f32.mrf.mxu0
        %v1599 = vpop.f32.mrf.mxu0
        %1600 = vdwg.mxu0
        %v1601 = vmul.f32 %v1596, 0.5
        %v1602 = vmul.f32 %v1596, 0.044715
        %v1603 = vmul.f32 %v1602, %v1596
        %v1604 = vmul.f32 %v1603, %v1596
        %v1605 = vadd.f32 %v1596, %v1604
        %v1606 = vmul.f32 %v1605, 0.7978846
        %v1607 = vtanh.pop %v1606
        %v1608 = vadd.f32 %v1607, 1.0
        %v1609 = vmul.f32 %v1601, %v1608
        %v1610 = vpack.c.bf16 %v1609, %v1609
        %v1611 = vld [vmem:[%s827] sm:$0xf]
        %v1612 = vld [vmem:[%s827 + $0x4] sm:$0xf]
        %v1613 = vld [vmem:[%s827 + $0x8] sm:$0xf]
        %v1614 = vld [vmem:[%s827 + $0xc] sm:$0xf]
        %v1615 = vld [vmem:[%s827 + $0x10] sm:$0xf]
        %v1616 = vld [vmem:[%s827 + $0x14] sm:$0xf]
        %v1617 = vld [vmem:[%s827 + $0x18] sm:$0xf]
        %v1618 = vld [vmem:[%s827 + $0x1c] sm:$0xf]
        %v1619 = vld [vmem:[%s827 + $0x20] sm:$0xf]
        %v1620 = vld [vmem:[%s827 + $0x24] sm:$0xf]
        %v1621 = vld [vmem:[%s827 + $0x28] sm:$0xf]
        %v1622 = vld [vmem:[%s827 + $0x2c] sm:$0xf]
        %v1623 = vld [vmem:[%s827 + $0x30] sm:$0xf]
        %v1624 = vld [vmem:[%s827 + $0x34] sm:$0xf]
        %v1625 = vld [vmem:[%s827 + $0x38] sm:$0xf]
        %v1626 = vld [vmem:[%s827 + $0x3c] sm:$0xf]
        %v1643 = vunpack.c.l.b16 %v1611
        %v1644 = vunpack.c.l.b16 %v1612
        %v1645 = vunpack.c.l.b16 %v1613
        %v1646 = vunpack.c.l.b16 %v1614
        %v1647 = vunpack.c.l.b16 %v1615
        %v1648 = vunpack.c.l.b16 %v1616
        %v1649 = vunpack.c.l.b16 %v1617
        %v1650 = vunpack.c.l.b16 %v1618
        %v1651 = vunpack.c.l.b16 %v1619
        %v1652 = vunpack.c.l.b16 %v1620
        %v1653 = vunpack.c.l.b16 %v1621
        %v1654 = vunpack.c.l.b16 %v1622
        %v1655 = vunpack.c.l.b16 %v1623
        %v1656 = vunpack.c.l.b16 %v1624
        %v1657 = vunpack.c.l.b16 %v1625
        %v1658 = vunpack.c.l.b16 %v1626
        %v1659 = vpack.c.b16 %v1644, %v1643
        %v1660 = vpack.c.b16 %v1646, %v1645
        %v1661 = vpack.c.b16 %v1648, %v1647
        %v1662 = vpack.c.b16 %v1650, %v1649
        %v1663 = vpack.c.b16 %v1652, %v1651
        %v1664 = vpack.c.b16 %v1654, %v1653
        %v1665 = vpack.c.b16 %v1656, %v1655
        %v1666 = vpack.c.b16 %v1658, %v1657
        %1675 = vmatprep.subr.bf16.mxu0 0
        %1676 = vmatpush1.bf16.msra.mxu0 %v1666
        %1677 = vmatprep.subr.bf16.mxu0 0
        %1678 = vmatpush1.bf16.msra.mxu0 %v1665
        %1679 = vmatprep.subr.bf16.mxu0 0
        %1680 = vmatpush1.bf16.msra.mxu0 %v1664
        %1681 = vmatprep.subr.bf16.mxu0 0
        %1682 = vmatpush1.bf16.msra.mxu0 %v1663
        %1683 = vmatprep.subr.bf16.mxu0 0
        %1684 = vmatpush1.bf16.msra.mxu0 %v1662
        %1685 = vmatprep.subr.bf16.mxu0 0
        %1686 = vmatpush1.bf16.msra.mxu0 %v1661
        %1687 = vmatprep.subr.bf16.mxu0 0
        %1688 = vmatpush1.bf16.msra.mxu0 %v1660
        %1689 = vmatprep.subr.bf16.mxu0 0
        %1690 = vmatpush1.bf16.msra.mxu0 %v1659
        %1691 = vmatprep.subr.bf16.mxu0 0
        %1692 = vmatpush2.bf16.msra.mxu0 0
        %1693 = vmatprep.subr.bf16.mxu0 0
        %1694 = vmatpush2.bf16.msra.mxu0 0
        %1695 = vmatprep.subr.bf16.mxu0 0
        %1696 = vmatpush2.bf16.msra.mxu0 0
        %1697 = vmatprep.subr.bf16.mxu0 0
        %1698 = vmatpush2.bf16.msra.mxu0 0
        %1699 = vmatprep.subr.bf16.mxu0 0
        %1700 = vmatpush2.bf16.msra.mxu0 0
        %1701 = vmatprep.subr.bf16.mxu0 0
        %1702 = vmatpush2.bf16.msra.mxu0 0
        %1703 = vmatprep.subr.bf16.mxu0 0
        %1704 = vmatpush2.bf16.msra.mxu0 0
        %1705 = vmatprep.subr.bf16.mxu0 0
        %1706 = vmatpush2.bf16.msra.mxu0 0
        %1707 = vmatprep.mubr.bf16.mxu0 0
        %1708 = vmatmul.mubr.bf16.gmra.mxu0 %v1610
        %v1709 = vpop.f32.mrf.mxu0
        %v1710 = vadd.f32 0.0, %v1709
        %v1711 = vpop.f32.mrf.mxu0
        %v1712 = vpop.f32.mrf.mxu0
        %v1713 = vpop.f32.mrf.mxu0
        %1714 = vdwg.mxu0
        %v1715 = vadd.f32 %v1504, %v1710
        %v1716 = vld [vmem:[%s830] sm:$0x1]
        %v1718 = vlaneseq
        %v1719 = vshrl.u32 %v1718, 7
        %v1720 = vsub.s32 0, %v1719
        %v1721 = vrot.slane %v1716, %v1720
        %v1723 = vadd.f32 %v1715, %v1721
        %1724 = vst.msk [vmem:[%s749] sm:$0xff] %vm866, %v1723
        %v1725 = vld [vmem:[%s13] sm:$0x1]
        %v1726 = vld [vmem:[%s14] sm:$0x1]
        %v1727 = vsel %vm866, %v1723, 0.0
        %1728 = vadd.xlane.f32.xlu0 %v1727
        %v1729 = vpop.xlane.xlu0 %1728
        %v1730 = vmul.f32 %v1729, %v870
        %v1731 = vsub.f32 %v1723, %v1730
        %v1732 = vmul.f32 %v1731, %v1731
        %v1733 = vsel %vm866, %v1732, 0.0
        %1734 = vadd.xlane.f32.xlu0 %v1733
        %v1735 = vpop.xlane.xlu0 %1734
        %v1736 = vmul.f32 %v1735, %v870
        %v1737 = vadd.f32 %v1736, 1e-05
        %v1738 = vrsqrt.pop %v1737
        %v1739 = vmul.f32 %v1731, %v1738
        %v1741 = vlaneseq
        %v1742 = vshrl.u32 %v1741, 7
        %v1743 = vsub.s32 0, %v1742
        %v1744 = vrot.slane %v1725, %v1743
        %v1746 = vmul.f32 %v1739, %v1744
        %v1748 = vlaneseq
        %v1749 = vshrl.u32 %v1748, 7
        %v1750 = vsub.s32 0, %v1749
        %v1751 = vrot.slane %v1726, %v1750
        %v1753 = vadd.f32 %v1746, %v1751
        %v1754 = vmul.f32 %v1753, %v1753
        %v1755 = vsel %vm866, %v1754, 0.0
        %1756 = vadd.xlane.f32.xlu0 %v1755
        %v1757 = vpop.xlane.xlu0 %1756
        %v1758 = vrsqrt.pop %v1757
        %v1759 = vmul.f32 %v1753, %v1758
        %v1761 = vsel %vm866, %v1759, 0
        %1763 = vmatprep.subr.mxu0 0.0
        %1764 = vmatpush1.xpose.msra.mxu0 0.0
        %1765 = vmatprep.subr.mxu0 0.0
        %1766 = vmatpush1.xpose.msra.mxu0 0.0
        %1767 = vmatprep.subr.mxu0 0.0
        %1768 = vmatpush1.xpose.msra.mxu0 0.0
        %1769 = vmatprep.subr.mxu0 0.0
        %1770 = vmatpush1.xpose.msra.mxu0 0.0
        %1771 = vmatprep.subr.mxu0 0.0
        %1772 = vmatpush1.xpose.msra.mxu0 0.0
        %1773 = vmatprep.subr.mxu0 0.0
        %1774 = vmatpush1.xpose.msra.mxu0 0.0
        %1775 = vmatprep.subr.mxu0 0.0
        %1776 = vmatpush1.xpose.msra.mxu0 0.0
        %1777 = vmatprep.subr.mxu0 0.0
        %1778 = vmatpush1.xpose.msra.mxu0 0.0
        %1779 = vmatprep.subr.mxu0 0.0
        %1780 = vmatpush1.xpose.msra.mxu0 0.0
        %1781 = vmatprep.subr.mxu0 0.0
        %1782 = vmatpush1.xpose.msra.mxu0 0.0
        %1783 = vmatprep.subr.mxu0 0.0
        %1784 = vmatpush1.xpose.msra.mxu0 0.0
        %1785 = vmatprep.subr.mxu0 0.0
        %1786 = vmatpush1.xpose.msra.mxu0 0.0
        %1787 = vmatprep.subr.mxu0 0.0
        %1788 = vmatpush1.xpose.msra.mxu0 0.0
        %1789 = vmatprep.subr.mxu0 0.0
        %1790 = vmatpush1.xpose.msra.mxu0 0.0
        %1791 = vmatprep.subr.mxu0 0.0
        %1792 = vmatpush1.xpose.msra.mxu0 0.0
        %1793 = vmatprep.subr.mxu0 0.0
        %1794 = vmatpush1.xpose.msra.mxu0 %v1761
        %1795 = vmatprep.subr.mxu0 0.0
        %1796 = vmatpush2.xpose.msra.mxu0 0.0
        %1797 = vmatprep.subr.mxu0 0.0
        %1798 = vmatpush2.xpose.msra.mxu0 0.0
        %1799 = vmatprep.subr.mxu0 0.0
        %1800 = vmatpush2.xpose.msra.mxu0 0.0
        %1801 = vmatprep.subr.mxu0 0.0
        %1802 = vmatpush2.xpose.msra.mxu0 0.0
        %1803 = vmatprep.subr.mxu0 0.0
        %1804 = vmatpush2.xpose.msra.mxu0 0.0
        %1805 = vmatprep.subr.mxu0 0.0
        %1806 = vmatpush2.xpose.msra.mxu0 0.0
        %1807 = vmatprep.subr.mxu0 0.0
        %1808 = vmatpush2.xpose.msra.mxu0 0.0
        %1809 = vmatprep.subr.mxu0 0.0
        %1810 = vmatpush2.xpose.msra.mxu0 0.0
        %1811 = vmatprep.subr.mxu0 0.0
        %1812 = vmatpush2.xpose.msra.mxu0 0.0
        %1813 = vmatprep.subr.mxu0 0.0
        %1814 = vmatpush2.xpose.msra.mxu0 0.0
        %1815 = vmatprep.subr.mxu0 0.0
        %1816 = vmatpush2.xpose.msra.mxu0 0.0
        %1817 = vmatprep.subr.mxu0 0.0
        %1818 = vmatpush2.xpose.msra.mxu0 0.0
        %1819 = vmatprep.subr.mxu0 0.0
        %1820 = vmatpush2.xpose.msra.mxu0 0.0
        %1821 = vmatprep.subr.mxu0 0.0
        %1822 = vmatpush2.xpose.msra.mxu0 0.0
        %1823 = vmatprep.subr.mxu0 0.0
        %1824 = vmatpush2.xpose.msra.mxu0 0.0
        %1825 = vmatprep.subr.mxu0 0.0
        %1826 = vmatpush2.xpose.msra.mxu0 0.0
        %1827 = vmatprep.mubr.f32.mxu0 0.0
        %1828 = vmatmul.mubr.f32.gmra.mxu0 %v1761
        %v1829 = vpop.f32.mrf.mxu0
        %v1830 = vadd.f32 0.0, %v1829
        %v1831 = vpop.f32.mrf.mxu0
        %1832 = vdwg.mxu0
        %1833 = vst.msk [vmem:[%s756] sm:$0xff] %vm971, %v1830
        %v1834 = vand.u32 2147483647, %v1830
        %vm1835 = vcmask 57344
        %v1836 = vsel %vm1835, %v1834, 0.0
        %1837 = vadd.xlane.f32.xlu0 %v1836
        %v1838 = vpop.xlane.xlu0 %1837
        %v1839 = vrcp.pop 8.0
        %v1840 = vmul.f32 %v1838, %v1839
        %vm1841 = vcmask 0
        %1842 = vst.msk [vmem:[%s841] sm:$0x1] %vm1841, %v1840
        %v1843 = vsel %vm971, %v1830, 0.0
        %1844 = vadd.xlane.f32.xlu0 %v1843
        %v1845 = vpop.xlane.xlu0 %1844
        %v1846 = vrot.slane %v1845, 4
        %v1847 = vadd.f32 %v1845, %v1846
        %v1848 = vrot.slane %v1847, 2
        %v1849 = vadd.f32 %v1847, %v1848
        %v1850 = vrot.slane %v1849, 1
        %v1851 = vadd.f32 %v1849, %v1850
        %s1852 = vtos %v1851
        %v1853 = vstv %s1852
        %v1854 = vrcp.pop 64.0
        %v1855 = vmul.f32 %v1853, %v1854
        %1856 = vst.msk [vmem:[%s852] sm:$0x1] %vm1841, %v1855
        %s1857 = sand.u32 %s443, 1
        %s1858 = scalar_lea.sflag [#allocation4], %s1857
        %s1859 = sand.u32 %s443, 1
        %s1860 = smul.addr %s1859, 8
        %s1861 = scalar_lea.vmem [#allocation3], %s1860
        %s1862 = sand.u32 %s473, 1
        %s1863 = scalar_lea.sflag [#allocation6], %s1862
        %s1864 = sand.u32 %s473, 1
        %s1865 = smul.addr %s1864, 8
        %s1866 = scalar_lea.vmem [#allocation5], %s1865
        %p1867 = scmp.lt.s32.totalorder %s41, 1
        %s1868 = scalar_select %p1867, %s41, 1
        %p1869 = scmp.lt.s32.totalorder %s42, 1
        %s1870 = scalar_select %p1869, %s42, 1
        %p1871 = scmp.lt.s32.totalorder %s43, 1
        %s1872 = scalar_select %p1871, %s43, 1
        %s1873 = smul.addr %s1870, 2
        %s1874 = sadd.s32 %s1872, %s1873
        %s1875 = smul.addr %s1868, 4
        %s1876 = sadd.s32 %s1874, %s1875
        %s1877 = scalar_lea.vmem %s17, %s1876
        %p1878 = scmp.lt.s32.totalorder %s41, 1
        %s1879 = scalar_select %p1878, %s41, 1
        %p1880 = scmp.lt.s32.totalorder %s42, 1
        %s1881 = scalar_select %p1880, %s42, 1
        %p1882 = scmp.lt.s32.totalorder %s43, 1
        %s1883 = scalar_select %p1882, %s43, 1
        %s1884 = smul.addr %s1881, 2
        %s1885 = sadd.s32 %s1883, %s1884
        %s1886 = smul.addr %s1879, 4
        %s1887 = sadd.s32 %s1885, %s1886
        %s1888 = scalar_lea.vmem %s18, %s1887
        // Predicated region
        $region85: #{tpu_custom_call.1} parent=79 // pred_check
          %p1889 = pneg %p453
        $region86: #{tpu_custom_call.1} parent=79 // pred_check_branch
          %1891 = sbr.rel (%p1889) target = $region88
        $region87: #{tpu_custom_call.1} parent=79 // pred_region
          %s1893 = ssub.s32 128, 128
          %1894 = vsyncadd %s1858, %s1893
          %s1895 = smul.addr %s41, 128
          %s1896 = scalar_lea.hbm %s15, %s1895
          %s1898 = sshll.u32 %s1861, 4
          %s1899 = int_to_ptr.vmem [resolvable:$true] %s1898
          %1901 = dma.vmem_to_hbm [thread:$0]  %s1899, 128, %s1896, %s1858
        $region88: #{tpu_custom_call.1} parent=79 // pred_fallthru
          _
        // Predicated region
        $region89: #{tpu_custom_call.1} parent=79 // pred_check
          %p1902 = pneg %p483
        $region90: #{tpu_custom_call.1} parent=79 // pred_check_branch
          %1904 = sbr.rel (%p1902) target = $region92
        $region91: #{tpu_custom_call.1} parent=79 // pred_region
          %s1906 = ssub.s32 128, 128
          %1907 = vsyncadd %s1863, %s1906
          %s1908 = smul.addr %s42, 2
          %s1909 = sadd.s32 %s43, %s1908
          %s1910 = smul.addr %s41, 4
          %s1911 = sadd.s32 %s1909, %s1910
          %s1912 = smul.addr %s1911, 128
          %s1913 = scalar_lea.hbm %s16, %s1912
          %s1915 = sshll.u32 %s1866, 4
          %s1916 = int_to_ptr.vmem [resolvable:$true] %s1915
          %1918 = dma.vmem_to_hbm [thread:$0]  %s1916, 128, %s1913, %s1863
        $region92: #{tpu_custom_call.1} parent=79 // pred_fallthru
          _
        // Predicated region
        $region93: #{tpu_custom_call.1} parent=79 // pred_check
          %p1919 = pneg %p513
        $region94: #{tpu_custom_call.1} parent=79 // pred_check_branch
          %1921 = sbr.rel (%p1919) target = $region96
        $region95: #{tpu_custom_call.1} parent=79 // pred_region
          _
        $region96: #{tpu_custom_call.1} parent=79 // pred_fallthru
          _
        // Predicated region
        $region97: #{tpu_custom_call.1} parent=79 // pred_check
          %p1922 = pneg %p543
        $region98: #{tpu_custom_call.1} parent=79 // pred_check_branch
          %1924 = sbr.rel (%p1922) target = $region100
        $region99: #{tpu_custom_call.1} parent=79 // pred_region
          _
        $region100: #{tpu_custom_call.1} parent=79 // pred_fallthru
          _
      $region80: #{tpu_custom_call.1} parent=5 // pred_fallthru
        _
      %p1925 = scmp.le.s32.totalorder 2, %s31
      // Predicated region
      $region101: #{tpu_custom_call.1} parent=5 // pred_check
        %p1926 = pneg %p1925
      $region102: #{tpu_custom_call.1} parent=5 // pred_check_branch
        %1928 = sbr.rel (%p1926) target = $region104
      $region103: #{tpu_custom_call.1} parent=5 // pred_region
        %s1929 = ssub.s32 %s31, 2
        // Predicated region
        $region105: #{tpu_custom_call.1} parent=103 // pred_check
          %p1930 = pneg %p459
        $region106: #{tpu_custom_call.1} parent=103 // pred_check_branch
          %1932 = sbr.rel (%p1930) target = $region108
        $region107: #{tpu_custom_call.1} parent=103 // pred_region
          %s1933 = sand.u32 %s444, 1
          %s1934 = scalar_lea.sflag [#allocation4], %s1933
          %s1935 = sand.u32 %s444, 1
          %s1936 = smul.addr %s1935, 8
          %s1937 = scalar_lea.vmem [#allocation3], %s1936
          %1938 = dma.done %s1934, 128
        $region108: #{tpu_custom_call.1} parent=103 // pred_fallthru
          _
        // Predicated region
        $region109: #{tpu_custom_call.1} parent=103 // pred_check
          %p1939 = pneg %p489
        $region110: #{tpu_custom_call.1} parent=103 // pred_check_branch
          %1941 = sbr.rel (%p1939) target = $region112
        $region111: #{tpu_custom_call.1} parent=103 // pred_region
          %s1942 = sand.u32 %s474, 1
          %s1943 = scalar_lea.sflag [#allocation6], %s1942
          %s1944 = sand.u32 %s474, 1
          %s1945 = smul.addr %s1944, 8
          %s1946 = scalar_lea.vmem [#allocation5], %s1945
          %1947 = dma.done %s1943, 128
        $region112: #{tpu_custom_call.1} parent=103 // pred_fallthru
          _
        // Predicated region
        $region113: #{tpu_custom_call.1} parent=103 // pred_check
          %p1948 = pneg %p519
        $region114: #{tpu_custom_call.1} parent=103 // pred_check_branch
          %1950 = sbr.rel (%p1948) target = $region116
        $region115: #{tpu_custom_call.1} parent=103 // pred_region
          %p1951 = scmp.lt.s32.totalorder %s44, 1
          %s1952 = scalar_select %p1951, %s44, 1
          %p1953 = scmp.lt.s32.totalorder %s45, 1
          %s1954 = scalar_select %p1953, %s45, 1
          %p1955 = scmp.lt.s32.totalorder %s46, 1
          %s1956 = scalar_select %p1955, %s46, 1
          %s1957 = smul.addr %s1954, 2
          %s1958 = sadd.s32 %s1956, %s1957
          %s1959 = smul.addr %s1952, 4
          %s1960 = sadd.s32 %s1958, %s1959
          %s1961 = scalar_lea.vmem %s17, %s1960
        $region116: #{tpu_custom_call.1} parent=103 // pred_fallthru
          _
        // Predicated region
        $region117: #{tpu_custom_call.1} parent=103 // pred_check
          %p1962 = pneg %p549
        $region118: #{tpu_custom_call.1} parent=103 // pred_check_branch
          %1964 = sbr.rel (%p1962) target = $region120
        $region119: #{tpu_custom_call.1} parent=103 // pred_region
          %p1965 = scmp.lt.s32.totalorder %s44, 1
          %s1966 = scalar_select %p1965, %s44, 1
          %p1967 = scmp.lt.s32.totalorder %s45, 1
          %s1968 = scalar_select %p1967, %s45, 1
          %p1969 = scmp.lt.s32.totalorder %s46, 1
          %s1970 = scalar_select %p1969, %s46, 1
          %s1971 = smul.addr %s1968, 2
          %s1972 = sadd.s32 %s1970, %s1971
          %s1973 = smul.addr %s1966, 4
          %s1974 = sadd.s32 %s1972, %s1973
          %s1975 = scalar_lea.vmem %s18, %s1974
        $region120: #{tpu_custom_call.1} parent=103 // pred_fallthru
          _
      $region104: #{tpu_custom_call.1} parent=5 // pred_fallthru
        _
    $region6: #{tpu_custom_call.1} parent=1 // loop_footer
      %s35 = sadd.s32 1, %s31
    $region7: #{tpu_custom_call.1} parent=1 // loop_footer_branch
      %30 = sbr.rel target = $region3
    $region8: #{tpu_custom_call.1} parent=1 // loop_exit
      _
    %1976 = vsyncpa [#allocation4], 1
    %s1977 = scalar_lea.sflag [#allocation4], 1
    %1978 = vsyncpa %s1977, 1
    %1979 = vsyncpa [#allocation6], 1
    %s1980 = scalar_lea.sflag [#allocation6], 1
    %1981 = vsyncpa %s1980, 1

</llo_original>
